<compile_context>
chip_gen: v6e
topology: v6e:2x2x1
jax: 0.10.0
libtpu: 0.0.40
codegen_flags: <defaults>
</compile_context>

<pallas_src>
import functools

import jax
import jax.numpy as jnp
from jax.experimental import pallas as pl
from jax.experimental.pallas import tpu as pltpu


def _attflat_kernel(x_ref, mask_ref, w1_ref, b1_ref, w2t_ref, b2_ref,
                    wm_ref, bm_ref, o_ref, *, glimpses, hidden):
    # x_ref: (TB, S, H) input dtype   mask_ref: (TB, S) f32 (1.0 = masked)
    # w1_ref: (H, M) stored dtype     b1_ref: (1, M) f32
    # w2t_ref: (G, M) f32             b2_ref: (1, G) f32
    # wm_ref: (G*H, OUT) stored dtype bm_ref: (1, OUT) f32
    # o_ref: (TB, OUT)
    tb, s, h = x_ref.shape
    x = x_ref[...]                                     # stay in stored dtype

    # ---- MLP layer 1 on the MXU (stored-dtype inputs, f32 accumulation) ----
    # TODO(synk): dropout inside FC is train-time only; skipped (eval mode).
    hid = jnp.dot(x.reshape(tb * s, h), w1_ref[...],
                  preferred_element_type=jnp.float32)
    hid = jnp.maximum(hid + b1_ref[...], 0.0)          # (TB*S, M) f32
    hid = hid.reshape(tb, s, -1)                       # free view (S % 8 == 0)

    # (TB, S, 1) f32 mask: tiny relayout of a lane-dense (TB, S) slab.
    maskf = mask_ref[...][:, :, None]                  # 1.0 = masked

    out = jnp.zeros(o_ref.shape, jnp.float32)
    for g in range(glimpses):
        # ---- glimpse projection on the VPU/XLU (N=G is too narrow for MXU) ----
        w2g = w2t_ref[g, :]                            # (M,) f32
        logits = jnp.sum(hid * w2g, axis=-1, keepdims=True) + b2_ref[0, g]
        # masked_fill(x_mask, -1e9)
        logits = jnp.where(maskf > 0.0, jnp.float32(-1e9), logits)

        # ---- softmax over the sequence axis (dim=1) ----
        mx = jnp.max(logits, axis=1, keepdims=True)
        e = jnp.exp(logits - mx)
        denom = jnp.sum(e, axis=1, keepdims=True)
        att = e * pl.reciprocal(denom, approx=False)   # (TB, S, 1) f32

        # ---- attention-weighted sum over seq ----
        feat = jnp.sum(att * x, axis=1)                # (TB, H) f32

        # ---- linear_merge: accumulate one glimpse slice of wm (no concat) ----
        out = out + jnp.dot(feat.astype(x.dtype),
                            wm_ref[pl.ds(g * hidden, hidden), :],
                            preferred_element_type=jnp.float32)

    o_ref[...] = (out + bm_ref[...]).astype(o_ref.dtype)


def _pick_batch_tile(batch, per_row_bytes, budget_bytes):
    """Largest batch tile that divides `batch`, fits the VMEM budget and gives a
    layout-legal (TB, OUT) output block (TB % 8 == 0 or TB == batch).  Prefers
    tiles that give >= 2 grid steps (v7x dual-TC sharding + DMA overlap)."""
    cap = max(1, budget_bytes // max(per_row_bytes, 1))
    legal = [tb for tb in range(1, batch + 1)
             if batch % tb == 0 and (tb % 8 == 0 or tb == batch)]
    fitting = [tb for tb in legal if tb <= cap]
    multi = [tb for tb in fitting if batch // tb >= 2]
    if multi:
        return max(multi)
    if fitting:
        return max(fitting)
    return min(legal)   # over the soft budget; smallest legal tile, best effort


def att_flat(x, x_mask, params, *, vmem_limit_bytes=None, x_buffer_count=None):
    """AttFlat forward.  x: (batch, seq, hidden); x_mask: (batch, seq) bool or None."""
    w1, b1, w2, b2, wm, bm = (params[k] for k in ("w1", "b1", "w2", "b2", "wm", "bm"))
    batch, seq, hidden = x.shape
    mid = w1.shape[1]
    glimpses = w2.shape[1]
    out_size = wm.shape[1]
    assert w1.shape == (hidden, mid)
    assert wm.shape == (glimpses * hidden, out_size)

    # ---- mask: lane-dense (B, S) f32 (1.0 = masked); pad seq to %8 == 0 ----
    if x_mask is None:
        mask = jnp.zeros((batch, seq), jnp.float32)
    else:
        mask = x_mask.reshape(batch, seq).astype(jnp.float32)
    seq_p = -(-seq // 8) * 8
    if seq_p != seq:
        x = jnp.pad(x, ((0, 0), (0, seq_p - seq), (0, 0)))
        mask = jnp.pad(mask, ((0, 0), (0, seq_p - seq)), constant_values=1.0)
        seq = seq_p

    # Small operands used on the VPU / added to f32 accumulators -> f32.
    # w2 transposed to (G, M) so the per-glimpse read is a sublane row slice.
    w2t = jnp.asarray(w2, jnp.float32).T
    b1r = jnp.asarray(b1, jnp.float32).reshape(1, mid)
    b2r = jnp.asarray(b2, jnp.float32).reshape(1, glimpses)
    bmr = jnp.asarray(bm, jnp.float32).reshape(1, out_size)

    # ---- generation-aware VMEM limit ----
    if vmem_limit_bytes is None:
        try:
            cap = int(pltpu.get_tpu_info().vmem_capacity_bytes)
        except Exception:
            cap = 64 * 1024 * 1024            # conservative (v7x per-TC size)
        # ~62% of physical: 40 MiB on v7x (64 MiB), 80 MiB on v5e/v6e (128 MiB)
        vmem_limit_bytes = min(int(cap * 0.625), 96 * 1024 * 1024)

    x_it = jnp.dtype(x.dtype).itemsize
    w_it = jnp.dtype(w1.dtype).itemsize
    wm_it = jnp.dtype(wm.dtype).itemsize

    def _weight_bytes(buffers):
        return buffers * (hidden * mid * w_it
                          + glimpses * hidden * out_size * wm_it
                          + glimpses * mid * 4
                          + (mid + glimpses + out_size) * 4)

    # Per-batch-row VMEM estimate: double-buffered x/mask/out tiles plus live
    # f32 intermediates (hid, att*x product, softmax stats, accumulators).
    per_row = (2 * (seq * hidden * x_it + seq * 4 + out_size * x_it)
               + seq * mid * 4            # hid (f32)
               + seq * hidden * 4         # att * x product (f32)
               + 4 * seq * 4              # logits / exp / att / mask (f32)
               + hidden * 4 + 2 * out_size * 4)

    kernel = functools.partial(_attflat_kernel, glimpses=glimpses, hidden=hidden)

    def _build_and_run(weight_buffers):
        budget = (vmem_limit_bytes - _weight_bytes(weight_buffers)
                  - 2 * 1024 * 1024)      # headroom for Mosaic internal scratch
        batch_tile = _pick_batch_tile(batch, per_row, budget)
        assert batch % batch_tile == 0
        grid = (batch // batch_tile,)

        wmode = {"pipeline_mode": pl.Buffered(1)} if weight_buffers == 1 else {}
        xmode = ({"pipeline_mode": pl.Buffered(x_buffer_count)}
                 if x_buffer_count is not None else {})

        return pl.pallas_call(
            kernel,
            out_shape=jax.ShapeDtypeStruct((batch, out_size), x.dtype),
            grid_spec=pltpu.PrefetchScalarGridSpec(
                num_scalar_prefetch=0,
                grid=grid,
                in_specs=[
                    pl.BlockSpec((batch_tile, seq, hidden), lambda i: (i, 0, 0), **xmode),
                    pl.BlockSpec((batch_tile, seq), lambda i: (i, 0)),
                    pl.BlockSpec((hidden, mid), lambda i: (0, 0), **wmode),
                    pl.BlockSpec((1, mid), lambda i: (0, 0), **wmode),
                    pl.BlockSpec((glimpses, mid), lambda i: (0, 0), **wmode),
                    pl.BlockSpec((1, glimpses), lambda i: (0, 0), **wmode),
                    pl.BlockSpec((glimpses * hidden, out_size), lambda i: (0, 0), **wmode),
                    pl.BlockSpec((1, out_size), lambda i: (0, 0), **wmode),
                ],
                out_specs=pl.BlockSpec((batch_tile, out_size), lambda i: (i, 0)),
            ),
            compiler_params=pltpu.CompilerParams(
                dimension_semantics=("parallel",),
                vmem_limit_bytes=vmem_limit_bytes,
            ),
        )(x, mask, w1, b1r, w2t, b2r, wm, bmr)

    try:
        # Preferred: single-buffered (never re-fetched) weight blocks.
        return _build_and_run(weight_buffers=1)
    except Exception:
        # Fallback for jax builds without pipeline_mode support on BlockSpec.
        return _build_and_run(weight_buffers=2)


def _reference(x, x_mask, params):
    """Pure-JAX reference matching the PyTorch AttFlat.forward (eval mode)."""
    w1, b1, w2, b2, wm, bm = (params[k] for k in ("w1", "b1", "w2", "b2", "wm", "bm"))
    glimpses = w2.shape[1]
    att = jnp.maximum(jnp.einsum("bsh,hm->bsm", x, w1) + b1, 0.0)
    att = jnp.einsum("bsm,mg->bsg", att, w2) + b2
    if x_mask is not None:
        att = jnp.where(x_mask[:, :, None], -1e9, att)
    att = jax.nn.softmax(att, axis=1)
    att_list = [jnp.sum(att[:, :, g:g + 1] * x, axis=1) for g in range(glimpses)]
    x_atted = jnp.concatenate(att_list, axis=1)
    return jnp.dot(x_atted, wm) + bm


if __name__ == "__main__":
    key = jax.random.PRNGKey(0)

    batch, seq, hidden = 2, 8, 32          # x: (batch, seq, HSIZE)
    mid, glimpses, out_size = 16, 2, 64    # ATTFLAT_MLP_SIZE / GLIMPSES / OUT_SIZE

    ks = jax.random.split(key, 8)
    x = jax.random.normal(ks[0], (batch, seq, hidden), dtype=jnp.float32)

    def _init(k, shape, fan_in):
        bound = 1.0 / float(fan_in) ** 0.5
        return jax.random.uniform(k, shape, jnp.float32, -bound, bound)

    params = dict(
        w1=_init(ks[1], (hidden, mid), hidden),
        b1=_init(ks[2], (mid,), hidden),
        w2=_init(ks[3], (mid, glimpses), mid),
        b2=_init(ks[4], (glimpses,), mid),
        wm=_init(ks[5], (glimpses * hidden, out_size), glimpses * hidden),
        bm=_init(ks[6], (out_size,), glimpses * hidden),
    )

    # Case 1: padding mask (True = masked): batch 0 keeps all 8 tokens, batch 1
    # keeps the first 5.
    lengths = jnp.array([seq, 5], dtype=jnp.int32)
    x_mask = jnp.arange(seq, dtype=jnp.int32)[None, :] >= lengths[:, None]

    out = jax.block_until_ready(att_flat(x, x_mask, params))
    ref = _reference(x, x_mask, params)
    assert out.shape == (batch, out_size)
    # Tolerance covers MXU default-precision f32 matmul passes on TPU.
    assert jnp.allclose(out, ref, atol=5e-3, rtol=5e-3), \
        float(jnp.max(jnp.abs(out - ref)))

    # Case 2: seq not a multiple of 8 (wrapper pads + masks the pad), no mask.
    seq2 = 6
    x2 = jax.random.normal(ks[7], (batch, seq2, hidden), dtype=jnp.float32)
    out2 = jax.block_until_ready(att_flat(x2, None, params))
    ref2 = _reference(x2, None, params)
    assert out2.shape == (batch, out_size)
    assert jnp.allclose(out2, ref2, atol=5e-3, rtol=5e-3), \
        float(jnp.max(jnp.abs(out2 - ref2)))

    print("KERNEL_OK")
</pallas_src>

<mosaic_0001>
module attributes {stable_mosaic.version = 11 : i64} {
  func.func @_attflat_kernel(%arg0: i32, %arg1: memref<2x8x32xf32, #tpu.memory_space<vmem>>, %arg2: memref<2x8xf32, #tpu.memory_space<vmem>>, %arg3: memref<32x16xf32, #tpu.memory_space<vmem>>, %arg4: memref<1x16xf32, #tpu.memory_space<vmem>>, %arg5: memref<2x16xf32, #tpu.memory_space<vmem>>, %arg6: memref<1x2xf32, #tpu.memory_space<vmem>>, %arg7: memref<64x64xf32, #tpu.memory_space<vmem>>, %arg8: memref<1x64xf32, #tpu.memory_space<vmem>>, %arg9: memref<2x64xf32, #tpu.memory_space<vmem>>) attributes {dimension_semantics = [#tpu.dimension_semantics<parallel>], iteration_bounds = array<i64: 1>, scalar_prefetch = 0 : i64, scratch_operands = 0 : i64, tpu.core_type = #tpu.core_type<tc>, window_params = [{transform_indices = @transform_0, window_bounds = array<i64: 2, 8, 32>}, {transform_indices = @transform_1, window_bounds = array<i64: 2, 8>}, {pipeline_mode = #tpu.pipeline_mode<synchronous>, transform_indices = @transform_2, window_bounds = array<i64: 32, 16>}, {pipeline_mode = #tpu.pipeline_mode<synchronous>, transform_indices = @transform_3, window_bounds = array<i64: 1, 16>}, {pipeline_mode = #tpu.pipeline_mode<synchronous>, transform_indices = @transform_4, window_bounds = array<i64: 2, 16>}, {pipeline_mode = #tpu.pipeline_mode<synchronous>, transform_indices = @transform_5, window_bounds = array<i64: 1, 2>}, {pipeline_mode = #tpu.pipeline_mode<synchronous>, transform_indices = @transform_6, window_bounds = array<i64: 64, 64>}, {pipeline_mode = #tpu.pipeline_mode<synchronous>, transform_indices = @transform_7, window_bounds = array<i64: 1, 64>}, {transform_indices = @transform_8, window_bounds = array<i64: 2, 64>}]} {
    %c0 = arith.constant 0 : index
    %c0_0 = arith.constant 0 : index
    %c0_1 = arith.constant 0 : index
    %0 = vector.load %arg1[%c0, %c0_0, %c0_1] : memref<2x8x32xf32, #tpu.memory_space<vmem>>, vector<2x8x32xf32>
    %1 = vector.shape_cast %0 : vector<2x8x32xf32> to vector<16x32xf32>
    %c0_2 = arith.constant 0 : index
    %c0_3 = arith.constant 0 : index
    %2 = vector.load %arg3[%c0_2, %c0_3] : memref<32x16xf32, #tpu.memory_space<vmem>>, vector<32x16xf32>
    %cst = arith.constant dense<0.000000e+00> : vector<16x16xf32>
    %3 = tpu.matmul %1, %2, %cst {dimension_numbers = #tpu.dot_dimension_numbers<[1], [0], [0], [1], [0, 0, 1, 1], [], []>} : vector<16x32xf32>, vector<32x16xf32>, vector<16x16xf32> -> vector<16x16xf32>
    %c0_4 = arith.constant 0 : index
    %c0_5 = arith.constant 0 : index
    %4 = vector.load %arg4[%c0_4, %c0_5] : memref<1x16xf32, #tpu.memory_space<vmem>>, vector<1x16xf32>
    %5 = vector.broadcast %4 : vector<1x16xf32> to vector<16x16xf32>
    %6 = arith.addf %3, %5 : vector<16x16xf32>
    %cst_6 = arith.constant 0.000000e+00 : f32
    %7 = vector.broadcast %cst_6 : f32 to vector<16x16xf32>
    %8 = arith.maximumf %6, %7 : vector<16x16xf32>
    %9 = vector.shape_cast %8 : vector<16x16xf32> to vector<2x8x16xf32>
    %c0_7 = arith.constant 0 : index
    %c0_8 = arith.constant 0 : index
    %10 = vector.load %arg2[%c0_7, %c0_8] : memref<2x8xf32, #tpu.memory_space<vmem>>, vector<2x8xf32>
    %11 = vector.shape_cast %10 : vector<2x8xf32> to vector<2x8x1xf32>
    %cst_9 = arith.constant 0.000000e+00 : f32
    %12 = vector.broadcast %cst_9 : f32 to vector<2x64xf32>
    %c0_10 = arith.constant 0 : index
    %c0_11 = arith.constant 0 : index
    %13 = vector.load %arg5[%c0_10, %c0_11] : memref<2x16xf32, #tpu.memory_space<vmem>>, vector<1x16xf32>
    %14 = vector.shape_cast %13 : vector<1x16xf32> to vector<16xf32>
    %15 = vector.shape_cast %14 : vector<16xf32> to vector<1x1x16xf32>
    %16 = vector.broadcast %15 : vector<1x1x16xf32> to vector<2x8x16xf32>
    %17 = arith.mulf %9, %16 : vector<2x8x16xf32>
    %cst_12 = arith.constant dense<0.000000e+00> : vector<2x8xf32>
    %18 = vector.multi_reduction <add>, %17, %cst_12 [2] : vector<2x8x16xf32> to vector<2x8xf32>
    %19 = vector.shape_cast %18 : vector<2x8xf32> to vector<2x8x1xf32>
    %c0_13 = arith.constant 0 : index
    %c0_14 = arith.constant 0 : index
    %20 = vector.load %arg6[%c0_13, %c0_14] : memref<1x2xf32, #tpu.memory_space<vmem>>, vector<1x1xf32>
    %21 = vector.extract %20[0, 0] : f32 from vector<1x1xf32>
    %22 = vector.broadcast %21 : f32 to vector<2x8x1xf32>
    %23 = arith.addf %19, %22 : vector<2x8x1xf32>
    %cst_15 = arith.constant 0.000000e+00 : f32
    %24 = vector.broadcast %cst_15 : f32 to vector<2x8x1xf32>
    %25 = arith.cmpf ogt, %11, %24 : vector<2x8x1xf32>
    %cst_16 = arith.constant -1.000000e+09 : f32
    %26 = vector.broadcast %cst_16 : f32 to vector<2x8x1xf32>
    %27 = arith.select %25, %26, %23 : vector<2x8x1xi1>, vector<2x8x1xf32>
    %cst_17 = arith.constant dense<0xFF800000> : vector<2x1xf32>
    %28 = vector.multi_reduction <maximumf>, %27, %cst_17 [1] : vector<2x8x1xf32> to vector<2x1xf32>
    %29 = vector.shape_cast %28 : vector<2x1xf32> to vector<2x1x1xf32>
    %30 = vector.broadcast %29 : vector<2x1x1xf32> to vector<2x8x1xf32>
    %31 = arith.subf %27, %30 : vector<2x8x1xf32>
    %32 = math.exp %31 : vector<2x8x1xf32>
    %cst_18 = arith.constant dense<0.000000e+00> : vector<2x1xf32>
    %33 = vector.multi_reduction <add>, %32, %cst_18 [1] : vector<2x8x1xf32> to vector<2x1xf32>
    %34 = vector.shape_cast %33 : vector<2x1xf32> to vector<2x1x1xf32>
    %35 = tpu.reciprocal %34 : vector<2x1x1xf32> -> vector<2x1x1xf32>
    %36 = vector.broadcast %35 : vector<2x1x1xf32> to vector<2x8x1xf32>
    %37 = arith.mulf %32, %36 : vector<2x8x1xf32>
    %38 = vector.broadcast %37 : vector<2x8x1xf32> to vector<2x8x32xf32>
    %39 = arith.mulf %38, %0 : vector<2x8x32xf32>
    %cst_19 = arith.constant dense<0.000000e+00> : vector<2x32xf32>
    %40 = vector.multi_reduction <add>, %39, %cst_19 [1] : vector<2x8x32xf32> to vector<2x32xf32>
    %c0_20 = arith.constant 0 : index
    %c0_21 = arith.constant 0 : index
    %41 = vector.load %arg7[%c0_20, %c0_21] : memref<64x64xf32, #tpu.memory_space<vmem>>, vector<32x64xf32>
    %cst_22 = arith.constant dense<0.000000e+00> : vector<2x64xf32>
    %42 = tpu.matmul %40, %41, %cst_22 {dimension_numbers = #tpu.dot_dimension_numbers<[1], [0], [0], [1], [0, 0, 1, 1], [], []>} : vector<2x32xf32>, vector<32x64xf32>, vector<2x64xf32> -> vector<2x64xf32>
    %43 = arith.addf %12, %42 : vector<2x64xf32>
    %c1 = arith.constant 1 : index
    %c0_23 = arith.constant 0 : index
    %44 = vector.load %arg5[%c1, %c0_23] : memref<2x16xf32, #tpu.memory_space<vmem>>, vector<1x16xf32>
    %45 = vector.shape_cast %44 : vector<1x16xf32> to vector<16xf32>
    %46 = vector.shape_cast %45 : vector<16xf32> to vector<1x1x16xf32>
    %47 = vector.broadcast %46 : vector<1x1x16xf32> to vector<2x8x16xf32>
    %48 = arith.mulf %9, %47 : vector<2x8x16xf32>
    %cst_24 = arith.constant dense<0.000000e+00> : vector<2x8xf32>
    %49 = vector.multi_reduction <add>, %48, %cst_24 [2] : vector<2x8x16xf32> to vector<2x8xf32>
    %50 = vector.shape_cast %49 : vector<2x8xf32> to vector<2x8x1xf32>
    %c0_25 = arith.constant 0 : index
    %c1_26 = arith.constant 1 : index
    %51 = vector.load %arg6[%c0_25, %c1_26] : memref<1x2xf32, #tpu.memory_space<vmem>>, vector<1x1xf32>
    %52 = vector.extract %51[0, 0] : f32 from vector<1x1xf32>
    %53 = vector.broadcast %52 : f32 to vector<2x8x1xf32>
    %54 = arith.addf %50, %53 : vector<2x8x1xf32>
    %cst_27 = arith.constant 0.000000e+00 : f32
    %55 = vector.broadcast %cst_27 : f32 to vector<2x8x1xf32>
    %56 = arith.cmpf ogt, %11, %55 : vector<2x8x1xf32>
    %cst_28 = arith.constant -1.000000e+09 : f32
    %57 = vector.broadcast %cst_28 : f32 to vector<2x8x1xf32>
    %58 = arith.select %56, %57, %54 : vector<2x8x1xi1>, vector<2x8x1xf32>
    %cst_29 = arith.constant dense<0xFF800000> : vector<2x1xf32>
    %59 = vector.multi_reduction <maximumf>, %58, %cst_29 [1] : vector<2x8x1xf32> to vector<2x1xf32>
    %60 = vector.shape_cast %59 : vector<2x1xf32> to vector<2x1x1xf32>
    %61 = vector.broadcast %60 : vector<2x1x1xf32> to vector<2x8x1xf32>
    %62 = arith.subf %58, %61 : vector<2x8x1xf32>
    %63 = math.exp %62 : vector<2x8x1xf32>
    %cst_30 = arith.constant dense<0.000000e+00> : vector<2x1xf32>
    %64 = vector.multi_reduction <add>, %63, %cst_30 [1] : vector<2x8x1xf32> to vector<2x1xf32>
    %65 = vector.shape_cast %64 : vector<2x1xf32> to vector<2x1x1xf32>
    %66 = tpu.reciprocal %65 : vector<2x1x1xf32> -> vector<2x1x1xf32>
    %67 = vector.broadcast %66 : vector<2x1x1xf32> to vector<2x8x1xf32>
    %68 = arith.mulf %63, %67 : vector<2x8x1xf32>
    %69 = vector.broadcast %68 : vector<2x8x1xf32> to vector<2x8x32xf32>
    %70 = arith.mulf %69, %0 : vector<2x8x32xf32>
    %cst_31 = arith.constant dense<0.000000e+00> : vector<2x32xf32>
    %71 = vector.multi_reduction <add>, %70, %cst_31 [1] : vector<2x8x32xf32> to vector<2x32xf32>
    %c32 = arith.constant 32 : index
    %c0_32 = arith.constant 0 : index
    %72 = vector.load %arg7[%c32, %c0_32] : memref<64x64xf32, #tpu.memory_space<vmem>>, vector<32x64xf32>
    %cst_33 = arith.constant dense<0.000000e+00> : vector<2x64xf32>
    %73 = tpu.matmul %71, %72, %cst_33 {dimension_numbers = #tpu.dot_dimension_numbers<[1], [0], [0], [1], [0, 0, 1, 1], [], []>} : vector<2x32xf32>, vector<32x64xf32>, vector<2x64xf32> -> vector<2x64xf32>
    %74 = arith.addf %43, %73 : vector<2x64xf32>
    %c0_34 = arith.constant 0 : index
    %c0_35 = arith.constant 0 : index
    %75 = vector.load %arg8[%c0_34, %c0_35] : memref<1x64xf32, #tpu.memory_space<vmem>>, vector<1x64xf32>
    %76 = vector.broadcast %75 : vector<1x64xf32> to vector<2x64xf32>
    %77 = arith.addf %74, %76 : vector<2x64xf32>
    %c0_36 = arith.constant 0 : index
    %c0_37 = arith.constant 0 : index
    %78 = vector.load %arg9[%c0_36, %c0_37] : memref<2x64xf32, #tpu.memory_space<vmem>>, vector<2x64xf32>
    tpu.vector_store %arg9[%c0_36, %c0_37], %77 {strides = array<i32>} : memref<2x64xf32, #tpu.memory_space<vmem>>, vector<2x64xf32>,
    return
  }
  func.func @transform_0(%arg0: i32) -> (i32, i32, i32) {
    %c0_i32 = arith.constant 0 : i32
    %c0_i32_0 = arith.constant 0 : i32
    %c0_i32_1 = arith.constant 0 : i32
    return %arg0, %c0_i32, %c0_i32_0 : i32, i32, i32
  }
  func.func @transform_1(%arg0: i32) -> (i32, i32) {
    %c0_i32 = arith.constant 0 : i32
    %c0_i32_0 = arith.constant 0 : i32
    return %arg0, %c0_i32 : i32, i32
  }
  func.func @transform_2(%arg0: i32) -> (i32, i32) {
    %c0_i32 = arith.constant 0 : i32
    %c0_i32_0 = arith.constant 0 : i32
    %c0_i32_1 = arith.constant 0 : i32
    return %c0_i32, %c0_i32_0 : i32, i32
  }
  func.func @transform_3(%arg0: i32) -> (i32, i32) {
    %c0_i32 = arith.constant 0 : i32
    %c0_i32_0 = arith.constant 0 : i32
    %c0_i32_1 = arith.constant 0 : i32
    return %c0_i32, %c0_i32_0 : i32, i32
  }
  func.func @transform_4(%arg0: i32) -> (i32, i32) {
    %c0_i32 = arith.constant 0 : i32
    %c0_i32_0 = arith.constant 0 : i32
    %c0_i32_1 = arith.constant 0 : i32
    return %c0_i32, %c0_i32_0 : i32, i32
  }
  func.func @transform_5(%arg0: i32) -> (i32, i32) {
    %c0_i32 = arith.constant 0 : i32
    %c0_i32_0 = arith.constant 0 : i32
    %c0_i32_1 = arith.constant 0 : i32
    return %c0_i32, %c0_i32_0 : i32, i32
  }
  func.func @transform_6(%arg0: i32) -> (i32, i32) {
    %c0_i32 = arith.constant 0 : i32
    %c0_i32_0 = arith.constant 0 : i32
    %c0_i32_1 = arith.constant 0 : i32
    return %c0_i32, %c0_i32_0 : i32, i32
  }
  func.func @transform_7(%arg0: i32) -> (i32, i32) {
    %c0_i32 = arith.constant 0 : i32
    %c0_i32_0 = arith.constant 0 : i32
    %c0_i32_1 = arith.constant 0 : i32
    return %c0_i32, %c0_i32_0 : i32, i32
  }
  func.func @transform_8(%arg0: i32) -> (i32, i32) {
    %c0_i32 = arith.constant 0 : i32
    %c0_i32_0 = arith.constant 0 : i32
    return %arg0, %c0_i32 : i32, i32
  }
}

module attributes {stable_mosaic.version = 11 : i64} {
  func.func @_attflat_kernel(%arg0: i32, %arg1: memref<2x8x32xf32, #tpu.memory_space<vmem>>, %arg2: memref<2x8xf32, #tpu.memory_space<vmem>>, %arg3: memref<32x16xf32, #tpu.memory_space<vmem>>, %arg4: memref<1x16xf32, #tpu.memory_space<vmem>>, %arg5: memref<2x16xf32, #tpu.memory_space<vmem>>, %arg6: memref<1x2xf32, #tpu.memory_space<vmem>>, %arg7: memref<64x64xf32, #tpu.memory_space<vmem>>, %arg8: memref<1x64xf32, #tpu.memory_space<vmem>>, %arg9: memref<2x64xf32, #tpu.memory_space<vmem>>) attributes {dimension_semantics = [#tpu.dimension_semantics<parallel>], iteration_bounds = array<i64: 1>, scalar_prefetch = 0 : i64, scratch_operands = 0 : i64, tpu.core_type = #tpu.core_type<tc>, window_params = [{transform_indices = @transform_0, window_bounds = array<i64: 2, 8, 32>}, {transform_indices = @transform_1, window_bounds = array<i64: 2, 8>}, {pipeline_mode = #tpu.pipeline_mode<synchronous>, transform_indices = @transform_2, window_bounds = array<i64: 32, 16>}, {pipeline_mode = #tpu.pipeline_mode<synchronous>, transform_indices = @transform_3, window_bounds = array<i64: 1, 16>}, {pipeline_mode = #tpu.pipeline_mode<synchronous>, transform_indices = @transform_4, window_bounds = array<i64: 2, 16>}, {pipeline_mode = #tpu.pipeline_mode<synchronous>, transform_indices = @transform_5, window_bounds = array<i64: 1, 2>}, {pipeline_mode = #tpu.pipeline_mode<synchronous>, transform_indices = @transform_6, window_bounds = array<i64: 64, 64>}, {pipeline_mode = #tpu.pipeline_mode<synchronous>, transform_indices = @transform_7, window_bounds = array<i64: 1, 64>}, {transform_indices = @transform_8, window_bounds = array<i64: 2, 64>}]} {
    %c0 = arith.constant 0 : index
    %c0_0 = arith.constant 0 : index
    %c0_1 = arith.constant 0 : index
    %0 = vector.load %arg1[%c0, %c0_0, %c0_1] : memref<2x8x32xf32, #tpu.memory_space<vmem>>, vector<2x8x32xf32>
    %1 = vector.shape_cast %0 : vector<2x8x32xf32> to vector<16x32xf32>
    %c0_2 = arith.constant 0 : index
    %c0_3 = arith.constant 0 : index
    %2 = vector.load %arg3[%c0_2, %c0_3] : memref<32x16xf32, #tpu.memory_space<vmem>>, vector<32x16xf32>
    %cst = arith.constant dense<0.000000e+00> : vector<16x16xf32>
    %3 = tpu.matmul %1, %2, %cst {dimension_numbers = #tpu.dot_dimension_numbers<[1], [0], [0], [1], [0, 0, 1, 1], [], []>} : vector<16x32xf32>, vector<32x16xf32>, vector<16x16xf32> -> vector<16x16xf32>
    %c0_4 = arith.constant 0 : index
    %c0_5 = arith.constant 0 : index
    %4 = vector.load %arg4[%c0_4, %c0_5] : memref<1x16xf32, #tpu.memory_space<vmem>>, vector<1x16xf32>
    %5 = vector.broadcast %4 : vector<1x16xf32> to vector<16x16xf32>
    %6 = arith.addf %3, %5 : vector<16x16xf32>
    %cst_6 = arith.constant 0.000000e+00 : f32
    %7 = vector.broadcast %cst_6 : f32 to vector<16x16xf32>
    %8 = arith.maximumf %6, %7 : vector<16x16xf32>
    %9 = vector.shape_cast %8 : vector<16x16xf32> to vector<2x8x16xf32>
    %c0_7 = arith.constant 0 : index
    %c0_8 = arith.constant 0 : index
    %10 = vector.load %arg2[%c0_7, %c0_8] : memref<2x8xf32, #tpu.memory_space<vmem>>, vector<2x8xf32>
    %11 = vector.shape_cast %10 : vector<2x8xf32> to vector<2x8x1xf32>
    %cst_9 = arith.constant 0.000000e+00 : f32
    %12 = vector.broadcast %cst_9 : f32 to vector<2x64xf32>
    %c0_10 = arith.constant 0 : index
    %c0_11 = arith.constant 0 : index
    %13 = vector.load %arg5[%c0_10, %c0_11] : memref<2x16xf32, #tpu.memory_space<vmem>>, vector<1x16xf32>
    %14 = vector.shape_cast %13 : vector<1x16xf32> to vector<16xf32>
    %15 = vector.shape_cast %14 : vector<16xf32> to vector<1x1x16xf32>
    %16 = vector.broadcast %15 : vector<1x1x16xf32> to vector<2x8x16xf32>
    %17 = arith.mulf %9, %16 : vector<2x8x16xf32>
    %cst_12 = arith.constant dense<0.000000e+00> : vector<2x8xf32>
    %18 = vector.multi_reduction <add>, %17, %cst_12 [2] : vector<2x8x16xf32> to vector<2x8xf32>
    %19 = vector.shape_cast %18 : vector<2x8xf32> to vector<2x8x1xf32>
    %c0_13 = arith.constant 0 : index
    %c0_14 = arith.constant 0 : index
    %20 = vector.load %arg6[%c0_13, %c0_14] : memref<1x2xf32, #tpu.memory_space<vmem>>, vector<1x1xf32>
    %21 = vector.extract %20[0, 0] : f32 from vector<1x1xf32>
    %22 = vector.broadcast %21 : f32 to vector<2x8x1xf32>
    %23 = arith.addf %19, %22 : vector<2x8x1xf32>
    %cst_15 = arith.constant 0.000000e+00 : f32
    %24 = vector.broadcast %cst_15 : f32 to vector<2x8x1xf32>
    %25 = arith.cmpf ogt, %11, %24 : vector<2x8x1xf32>
    %cst_16 = arith.constant -1.000000e+09 : f32
    %26 = vector.broadcast %cst_16 : f32 to vector<2x8x1xf32>
    %27 = arith.select %25, %26, %23 : vector<2x8x1xi1>, vector<2x8x1xf32>
    %cst_17 = arith.constant dense<0xFF800000> : vector<2x1xf32>
    %28 = vector.multi_reduction <maximumf>, %27, %cst_17 [1] : vector<2x8x1xf32> to vector<2x1xf32>
    %29 = vector.shape_cast %28 : vector<2x1xf32> to vector<2x1x1xf32>
    %30 = vector.broadcast %29 : vector<2x1x1xf32> to vector<2x8x1xf32>
    %31 = arith.subf %27, %30 : vector<2x8x1xf32>
    %32 = math.exp %31 : vector<2x8x1xf32>
    %cst_18 = arith.constant dense<0.000000e+00> : vector<2x1xf32>
    %33 = vector.multi_reduction <add>, %32, %cst_18 [1] : vector<2x8x1xf32> to vector<2x1xf32>
    %34 = vector.shape_cast %33 : vector<2x1xf32> to vector<2x1x1xf32>
    %35 = tpu.reciprocal %34 : vector<2x1x1xf32> -> vector<2x1x1xf32>
    %36 = vector.broadcast %35 : vector<2x1x1xf32> to vector<2x8x1xf32>
    %37 = arith.mulf %32, %36 : vector<2x8x1xf32>
    %38 = vector.broadcast %37 : vector<2x8x1xf32> to vector<2x8x32xf32>
    %39 = arith.mulf %38, %0 : vector<2x8x32xf32>
    %cst_19 = arith.constant dense<0.000000e+00> : vector<2x32xf32>
    %40 = vector.multi_reduction <add>, %39, %cst_19 [1] : vector<2x8x32xf32> to vector<2x32xf32>
    %c0_20 = arith.constant 0 : index
    %c0_21 = arith.constant 0 : index
    %41 = vector.load %arg7[%c0_20, %c0_21] : memref<64x64xf32, #tpu.memory_space<vmem>>, vector<32x64xf32>
    %cst_22 = arith.constant dense<0.000000e+00> : vector<2x64xf32>
    %42 = tpu.matmul %40, %41, %cst_22 {dimension_numbers = #tpu.dot_dimension_numbers<[1], [0], [0], [1], [0, 0, 1, 1], [], []>} : vector<2x32xf32>, vector<32x64xf32>, vector<2x64xf32> -> vector<2x64xf32>
    %43 = arith.addf %12, %42 : vector<2x64xf32>
    %c1 = arith.constant 1 : index
    %c0_23 = arith.constant 0 : index
    %44 = vector.load %arg5[%c1, %c0_23] : memref<2x16xf32, #tpu.memory_space<vmem>>, vector<1x16xf32>
    %45 = vector.shape_cast %44 : vector<1x16xf32> to vector<16xf32>
    %46 = vector.shape_cast %45 : vector<16xf32> to vector<1x1x16xf32>
    %47 = vector.broadcast %46 : vector<1x1x16xf32> to vector<2x8x16xf32>
    %48 = arith.mulf %9, %47 : vector<2x8x16xf32>
    %cst_24 = arith.constant dense<0.000000e+00> : vector<2x8xf32>
    %49 = vector.multi_reduction <add>, %48, %cst_24 [2] : vector<2x8x16xf32> to vector<2x8xf32>
    %50 = vector.shape_cast %49 : vector<2x8xf32> to vector<2x8x1xf32>
    %c0_25 = arith.constant 0 : index
    %c1_26 = arith.constant 1 : index
    %51 = vector.load %arg6[%c0_25, %c1_26] : memref<1x2xf32, #tpu.memory_space<vmem>>, vector<1x1xf32>
    %52 = vector.extract %51[0, 0] : f32 from vector<1x1xf32>
    %53 = vector.broadcast %52 : f32 to vector<2x8x1xf32>
    %54 = arith.addf %50, %53 : vector<2x8x1xf32>
    %cst_27 = arith.constant 0.000000e+00 : f32
    %55 = vector.broadcast %cst_27 : f32 to vector<2x8x1xf32>
    %56 = arith.cmpf ogt, %11, %55 : vector<2x8x1xf32>
    %cst_28 = arith.constant -1.000000e+09 : f32
    %57 = vector.broadcast %cst_28 : f32 to vector<2x8x1xf32>
    %58 = arith.select %56, %57, %54 : vector<2x8x1xi1>, vector<2x8x1xf32>
    %cst_29 = arith.constant dense<0xFF800000> : vector<2x1xf32>
    %59 = vector.multi_reduction <maximumf>, %58, %cst_29 [1] : vector<2x8x1xf32> to vector<2x1xf32>
    %60 = vector.shape_cast %59 : vector<2x1xf32> to vector<2x1x1xf32>
    %61 = vector.broadcast %60 : vector<2x1x1xf32> to vector<2x8x1xf32>
    %62 = arith.subf %58, %61 : vector<2x8x1xf32>
    %63 = math.exp %62 : vector<2x8x1xf32>
    %cst_30 = arith.constant dense<0.000000e+00> : vector<2x1xf32>
    %64 = vector.multi_reduction <add>, %63, %cst_30 [1] : vector<2x8x1xf32> to vector<2x1xf32>
    %65 = vector.shape_cast %64 : vector<2x1xf32> to vector<2x1x1xf32>
    %66 = tpu.reciprocal %65 : vector<2x1x1xf32> -> vector<2x1x1xf32>
    %67 = vector.broadcast %66 : vector<2x1x1xf32> to vector<2x8x1xf32>
    %68 = arith.mulf %63, %67 : vector<2x8x1xf32>
    %69 = vector.broadcast %68 : vector<2x8x1xf32> to vector<2x8x32xf32>
    %70 = arith.mulf %69, %0 : vector<2x8x32xf32>
    %cst_31 = arith.constant dense<0.000000e+00> : vector<2x32xf32>
    %71 = vector.multi_reduction <add>, %70, %cst_31 [1] : vector<2x8x32xf32> to vector<2x32xf32>
    %c32 = arith.constant 32 : index
    %c0_32 = arith.constant 0 : index
    %72 = vector.load %arg7[%c32, %c0_32] : memref<64x64xf32, #tpu.memory_space<vmem>>, vector<32x64xf32>
    %cst_33 = arith.constant dense<0.000000e+00> : vector<2x64xf32>
    %73 = tpu.matmul %71, %72, %cst_33 {dimension_numbers = #tpu.dot_dimension_numbers<[1], [0], [0], [1], [0, 0, 1, 1], [], []>} : vector<2x32xf32>, vector<32x64xf32>, vector<2x64xf32> -> vector<2x64xf32>
    %74 = arith.addf %43, %73 : vector<2x64xf32>
    %c0_34 = arith.constant 0 : index
    %c0_35 = arith.constant 0 : index
    %75 = vector.load %arg8[%c0_34, %c0_35] : memref<1x64xf32, #tpu.memory_space<vmem>>, vector<1x64xf32>
    %76 = vector.broadcast %75 : vector<1x64xf32> to vector<2x64xf32>
    %77 = arith.addf %74, %76 : vector<2x64xf32>
    %c0_36 = arith.constant 0 : index
    %c0_37 = arith.constant 0 : index
    %78 = vector.load %arg9[%c0_36, %c0_37] : memref<2x64xf32, #tpu.memory_space<vmem>>, vector<2x64xf32>
    tpu.vector_store %arg9[%c0_36, %c0_37], %77 {strides = array<i32>} : memref<2x64xf32, #tpu.memory_space<vmem>>, vector<2x64xf32>,
    return
  }
  func.func @transform_0(%arg0: i32) -> (i32, i32, i32) {
    %c0_i32 = arith.constant 0 : i32
    %c0_i32_0 = arith.constant 0 : i32
    %c0_i32_1 = arith.constant 0 : i32
    return %arg0, %c0_i32, %c0_i32_0 : i32, i32, i32
  }
  func.func @transform_1(%arg0: i32) -> (i32, i32) {
    %c0_i32 = arith.constant 0 : i32
    %c0_i32_0 = arith.constant 0 : i32
    return %arg0, %c0_i32 : i32, i32
  }
  func.func @transform_2(%arg0: i32) -> (i32, i32) {
    %c0_i32 = arith.constant 0 : i32
    %c0_i32_0 = arith.constant 0 : i32
    %c0_i32_1 = arith.constant 0 : i32
    return %c0_i32, %c0_i32_0 : i32, i32
  }
  func.func @transform_3(%arg0: i32) -> (i32, i32) {
    %c0_i32 = arith.constant 0 : i32
    %c0_i32_0 = arith.constant 0 : i32
    %c0_i32_1 = arith.constant 0 : i32
    return %c0_i32, %c0_i32_0 : i32, i32
  }
  func.func @transform_4(%arg0: i32) -> (i32, i32) {
    %c0_i32 = arith.constant 0 : i32
    %c0_i32_0 = arith.constant 0 : i32
    %c0_i32_1 = arith.constant 0 : i32
    return %c0_i32, %c0_i32_0 : i32, i32
  }
  func.func @transform_5(%arg0: i32) -> (i32, i32) {
    %c0_i32 = arith.constant 0 : i32
    %c0_i32_0 = arith.constant 0 : i32
    %c0_i32_1 = arith.constant 0 : i32
    return %c0_i32, %c0_i32_0 : i32, i32
  }
  func.func @transform_6(%arg0: i32) -> (i32, i32) {
    %c0_i32 = arith.constant 0 : i32
    %c0_i32_0 = arith.constant 0 : i32
    %c0_i32_1 = arith.constant 0 : i32
    return %c0_i32, %c0_i32_0 : i32, i32
  }
  func.func @transform_7(%arg0: i32) -> (i32, i32) {
    %c0_i32 = arith.constant 0 : i32
    %c0_i32_0 = arith.constant 0 : i32
    %c0_i32_1 = arith.constant 0 : i32
    return %c0_i32, %c0_i32_0 : i32, i32
  }
  func.func @transform_8(%arg0: i32) -> (i32, i32) {
    %c0_i32 = arith.constant 0 : i32
    %c0_i32_0 = arith.constant 0 : i32
    return %arg0, %c0_i32 : i32, i32
  }
}

</mosaic_0001>

<llo_original>
// kernel: tpu_custom_call.1
$region0: #{tpu_custom_call.1}
  #allocation0 [shape = 'u32[]', space=smem, size = 0x4, offset = 0x4, fixed_abs, tag = 'smem constant byte address 0x4 - core index']
  #allocation1 [shape = 'u32[144,128]{1,0:T(1,128)}', space=vmem, size = 0x12000, scoped, tag = 'internal scratch']
  %s0 = inlined_call_operand.vmem [shape: f32[2,8,32], index: 0, kind: input, shape index: {}]
  %s1 = inlined_call_operand.vmem [shape: f32[2,8], index: 1, kind: input, shape index: {}]
  %s2 = inlined_call_operand.vmem [shape: f32[32,16], index: 2, kind: input, shape index: {}]
  %s3 = inlined_call_operand.vmem [shape: f32[1,16], index: 3, kind: input, shape index: {}]
  %s4 = inlined_call_operand.vmem [shape: f32[2,16], index: 4, kind: input, shape index: {}]
  %s5 = inlined_call_operand.vmem [shape: f32[1,2], index: 5, kind: input, shape index: {}]
  %s6 = inlined_call_operand.hbm [shape: f32[64,64], index: 6, kind: input, shape index: {}]
  %s7 = inlined_call_operand.vmem [shape: f32[1,64], index: 7, kind: input, shape index: {}]
  %s8 = inlined_call_operand.hbm [shape: f32[2,64], index: 8, kind: output, shape index: {}]
  %s9 = sld [smem:[#allocation0]]
  $region46: #{tpu_custom_call.1} parent=0
    _
  %s11 = ssub.s32 1, %s9
  %s12 = scalar_select 0, %s11, %s9
  $region1: #{tpu_custom_call.1} parent=0
    #allocation2 [shape = 'u8[32768]{0}', space=vmem, size = 0x8000, scoped, tag = 'input window, operand 6, single buffered']
    #allocation3 [shape = 's32[1]{0}', space=sflag, size = 0x4, scoped, tag = 'scoped memory for tpu_custom_call.1']
    #allocation4 [shape = 's32[1]{0}', space=sflag, size = 0x4, scoped, tag = 'scoped memory for tpu_custom_call.1']
    #allocation5 [shape = 'u8[1024]{0}', space=vmem, size = 0x400, scoped, tag = 'output window, operand 0, single buffered']
    %13 = vsyncpa [#allocation3], 0
    %14 = vsyncpa [#allocation4], 0
    // Predicated region
    $region2: #{tpu_custom_call.1} parent=1 // pred_check
      _
    $region3: #{tpu_custom_call.1} parent=1 // pred_check_branch
      %16 = sbr.rel (0) target = $region5
    $region4: #{tpu_custom_call.1} parent=1 // pred_region
      _
    $region5: #{tpu_custom_call.1} parent=1 // pred_fallthru
      _
    // Predicated region
    $region6: #{tpu_custom_call.1} parent=1 // pred_check
      _
    $region7: #{tpu_custom_call.1} parent=1 // pred_check_branch
      %18 = sbr.rel (0) target = $region9
    $region8: #{tpu_custom_call.1} parent=1 // pred_region
      _
    $region9: #{tpu_custom_call.1} parent=1 // pred_fallthru
      _
    // Predicated region
    $region10: #{tpu_custom_call.1} parent=1 // pred_check
      _
    $region11: #{tpu_custom_call.1} parent=1 // pred_check_branch
      %20 = sbr.rel (0) target = $region13
    $region12: #{tpu_custom_call.1} parent=1 // pred_region
      _
    $region13: #{tpu_custom_call.1} parent=1 // pred_fallthru
      _
    // Predicated region
    $region14: #{tpu_custom_call.1} parent=1 // pred_check
      _
    $region15: #{tpu_custom_call.1} parent=1 // pred_check_branch
      %22 = sbr.rel (0) target = $region17
    $region16: #{tpu_custom_call.1} parent=1 // pred_region
      _
    $region17: #{tpu_custom_call.1} parent=1 // pred_fallthru
      _
    // Predicated region
    $region18: #{tpu_custom_call.1} parent=1 // pred_check
      _
    $region19: #{tpu_custom_call.1} parent=1 // pred_check_branch
      %24 = sbr.rel (0) target = $region21
    $region20: #{tpu_custom_call.1} parent=1 // pred_region
      _
    $region21: #{tpu_custom_call.1} parent=1 // pred_fallthru
      _
    // Predicated region
    $region22: #{tpu_custom_call.1} parent=1 // pred_check
      _
    $region23: #{tpu_custom_call.1} parent=1 // pred_check_branch
      %26 = sbr.rel (0) target = $region25
    $region24: #{tpu_custom_call.1} parent=1 // pred_region
      _
    $region25: #{tpu_custom_call.1} parent=1 // pred_fallthru
      _
    // Predicated region
    $region26: #{tpu_custom_call.1} parent=1 // pred_check
      _
    $region27: #{tpu_custom_call.1} parent=1 // pred_check_branch
      %28 = sbr.rel (0) target = $region29
    $region28: #{tpu_custom_call.1} parent=1 // pred_region
      %s30 = ssub.s32 1024, 1024
      %31 = vsyncadd [#allocation3], %s30
      %s32 = sshll.u32 [#allocation2], 4
      %s33 = int_to_ptr.vmem [resolvable:$true] %s32
      %38 = dma.hbm_to_vmem [thread:$0]  %s6, 1024, %s33, [#allocation3], 128, 128, 8
    $region29: #{tpu_custom_call.1} parent=1 // pred_fallthru
      _
    // Predicated region
    $region30: #{tpu_custom_call.1} parent=1 // pred_check
      _
    $region31: #{tpu_custom_call.1} parent=1 // pred_check_branch
      %40 = sbr.rel (0) target = $region33
    $region32: #{tpu_custom_call.1} parent=1 // pred_region
      _
    $region33: #{tpu_custom_call.1} parent=1 // pred_fallthru
      _
    // Predicated region
    $region34: #{tpu_custom_call.1} parent=1 // pred_check
      _
    $region35: #{tpu_custom_call.1} parent=1 // pred_check_branch
      %42 = sbr.rel (0) target = $region37
    $region36: #{tpu_custom_call.1} parent=1 // pred_region
      %43 = dma.done [#allocation3], 1024
    $region37: #{tpu_custom_call.1} parent=1 // pred_fallthru
      _
    %v44 = vld [vmem:[%s0] sm:$0xff]
    %v45 = vld [vmem:[%s0 + $0x8] sm:$0xff]
    %v46 = vld [vmem:[%s2] sm:$0xff]
    %v47 = vld [vmem:[%s2 + $0x8] sm:$0xff]
    %v48 = vld [vmem:[%s2 + $0x10] sm:$0xff]
    %v49 = vld [vmem:[%s2 + $0x18] sm:$0xff]
    %v50 = vld [vmem:[%s3] sm:$0x1]
    %v52 = vlaneseq
    %v53 = vshrl.u32 %v52, 7
    %v54 = vsub.s32 0, %v53
    %v55 = vrot.slane %v50, %v54
    %vm57 = vcmask 261120
    %v59 = vsel %vm57, %v44, 0
    %v62 = vsel %vm57, %v45, 0
    %64 = vmatprep.subr.mxu0 0.0
    %65 = vmatpush1.msra.mxu0 0.0
    %66 = vmatprep.subr.mxu0 0.0
    %67 = vmatpush1.msra.mxu0 0.0
    %68 = vmatprep.subr.mxu0 0.0
    %69 = vmatpush1.msra.mxu0 0.0
    %70 = vmatprep.subr.mxu0 0.0
    %71 = vmatpush1.msra.mxu0 0.0
    %72 = vmatprep.subr.mxu0 0.0
    %73 = vmatpush1.msra.mxu0 0.0
    %74 = vmatprep.subr.mxu0 0.0
    %75 = vmatpush1.msra.mxu0 0.0
    %76 = vmatprep.subr.mxu0 0.0
    %77 = vmatpush1.msra.mxu0 0.0
    %78 = vmatprep.subr.mxu0 0.0
    %79 = vmatpush1.msra.mxu0 0.0
    %80 = vmatprep.subr.mxu0 0.0
    %81 = vmatpush1.msra.mxu0 0.0
    %82 = vmatprep.subr.mxu0 0.0
    %83 = vmatpush1.msra.mxu0 0.0
    %84 = vmatprep.subr.mxu0 0.0
    %85 = vmatpush1.msra.mxu0 0.0
    %86 = vmatprep.subr.mxu0 0.0
    %87 = vmatpush1.msra.mxu0 0.0
    %88 = vmatprep.subr.mxu0 0.0
    %89 = vmatpush1.msra.mxu0 %v49
    %90 = vmatprep.subr.mxu0 0.0
    %91 = vmatpush1.msra.mxu0 %v48
    %92 = vmatprep.subr.mxu0 0.0
    %93 = vmatpush1.msra.mxu0 %v47
    %94 = vmatprep.subr.mxu0 0.0
    %95 = vmatpush1.msra.mxu0 %v46
    %96 = vmatprep.subr.mxu0 0.0
    %97 = vmatpush2.msra.mxu0 0.0
    %98 = vmatprep.subr.mxu0 0.0
    %99 = vmatpush2.msra.mxu0 0.0
    %100 = vmatprep.subr.mxu0 0.0
    %101 = vmatpush2.msra.mxu0 0.0
    %102 = vmatprep.subr.mxu0 0.0
    %103 = vmatpush2.msra.mxu0 0.0
    %104 = vmatprep.subr.mxu0 0.0
    %105 = vmatpush2.msra.mxu0 0.0
    %106 = vmatprep.subr.mxu0 0.0
    %107 = vmatpush2.msra.mxu0 0.0
    %108 = vmatprep.subr.mxu0 0.0
    %109 = vmatpush2.msra.mxu0 0.0
    %110 = vmatprep.subr.mxu0 0.0
    %111 = vmatpush2.msra.mxu0 0.0
    %112 = vmatprep.subr.mxu0 0.0
    %113 = vmatpush2.msra.mxu0 0.0
    %114 = vmatprep.subr.mxu0 0.0
    %115 = vmatpush2.msra.mxu0 0.0
    %116 = vmatprep.subr.mxu0 0.0
    %117 = vmatpush2.msra.mxu0 0.0
    %118 = vmatprep.subr.mxu0 0.0
    %119 = vmatpush2.msra.mxu0 0.0
    %120 = vmatprep.subr.mxu0 0.0
    %121 = vmatpush2.msra.mxu0 0.0
    %122 = vmatprep.subr.mxu0 0.0
    %123 = vmatpush2.msra.mxu0 0.0
    %124 = vmatprep.subr.mxu0 0.0
    %125 = vmatpush2.msra.mxu0 0.0
    %126 = vmatprep.subr.mxu0 0.0
    %127 = vmatpush2.msra.mxu0 0.0
    %128 = vmatprep.mubr.f32.mxu0 0.0
    %129 = vmatmul.mubr.f32.gmra.mxu0 %v59
    %v130 = vpop.f32.mrf.mxu0
    %v131 = vadd.f32 %v55, %v130
    %v132 = vpop.f32.mrf.mxu0
    %133 = vmatprep.mubr.f32.mxu0 0.0
    %134 = vmatmul.mubr.f32.gmra.mxu0 %v62
    %v135 = vpop.f32.mrf.mxu0
    %v136 = vadd.f32 %v55, %v135
    %v137 = vpop.f32.mrf.mxu0
    %138 = vdwg.mxu0
    %v139 = vmax.f32 %v131, 0.0
    %v140 = vmax.f32 %v136, 0.0
    %v141 = vld [vmem:[%s1] sm:$0x3]
    %v142 = vlaneseq
    %v143 = vshrl.u32 %v142, 7
    %v144 = vsub.s32 0, %v143
    %v145 = vrot.slane %v141, %v144
    %147 = vbcast.lane.b32.xlu0 %v145, 256
    %v148 = vpop.permute.xlu0 %147
    %v149 = vlaneseq
    %v150 = vshrl.u32 %v149, 7
    %v151 = vsub.s32 1, %v150
    %v152 = vrot.slane %v141, %v151
    %154 = vbcast.lane.b32.xlu0 %v152, 256
    %v155 = vpop.permute.xlu0 %154
    %v156 = vld [vmem:[%s4] sm:$0x1]
    %v157 = vlaneseq
    %v158 = vshrl.u32 %v157, 7
    %v159 = vsub.s32 0, %v158
    %v160 = vrot.slane %v156, %v159
    %v161 = vmul.f32 %v139, %v160
    %v162 = vmul.f32 %v140, %v160
    %vm163 = vcmask 130048
    %v164 = vsel %vm163, %v161, 0.0
    %165 = vadd.xlane.f32.xlu0 %v164
    %v166 = vpop.xlane.xlu0 %165
    %v167 = vsel %vm163, %v162, 0.0
    %168 = vadd.xlane.f32.xlu0 %v167
    %v169 = vpop.xlane.xlu0 %168
    %v170 = vld [vmem:[%s5] sm:$0x1]
    %s171 = vtos %v170
    %v172 = vstv %s171
    %v173 = vadd.f32 %v166, %v172
    %v174 = vadd.f32 %v169, %v172
    %vm175 = vcmp.gt.f32.partialorder %v148, 0.0
    %vm176 = vcmp.gt.f32.partialorder %v155, 0.0
    %v177 = vsel %vm175, -1e+09, %v173
    %v178 = vsel %vm176, -1e+09, %v174
    %v179 = vrot.slane %v177, 4
    %v180 = vmax.f32 %v177, %v179
    %v181 = vrot.slane %v180, 2
    %v182 = vmax.f32 %v180, %v181
    %v183 = vrot.slane %v182, 1
    %v184 = vmax.f32 %v182, %v183
    %v185 = vrot.slane %v178, 4
    %v186 = vmax.f32 %v178, %v185
    %v187 = vrot.slane %v186, 2
    %v188 = vmax.f32 %v186, %v187
    %v189 = vrot.slane %v188, 1
    %v190 = vmax.f32 %v188, %v189
    %v191 = vsub.f32 %v177, %v184
    %v192 = vsub.f32 %v178, %v190
    %v193 = vmul.f32 %v191, 1.442695
    %v194 = vpow.pop %v193
    %v195 = vmul.f32 %v192, 1.442695
    %v196 = vpow.pop %v195
    %v197 = vrot.slane %v194, 4
    %v198 = vadd.f32 %v194, %v197
    %v199 = vrot.slane %v198, 2
    %v200 = vadd.f32 %v198, %v199
    %v201 = vrot.slane %v200, 1
    %v202 = vadd.f32 %v200, %v201
    %v203 = vrot.slane %v196, 4
    %v204 = vadd.f32 %v196, %v203
    %v205 = vrot.slane %v204, 2
    %v206 = vadd.f32 %v204, %v205
    %v207 = vrot.slane %v206, 1
    %v208 = vadd.f32 %v206, %v207
    %v209 = vrcp.pop %v202
    %v210 = vrcp.pop %v208
    %v211 = vmul.f32 %v194, %v209
    %v212 = vmul.f32 %v196, %v210
    %v213 = vmul.f32 %v211, %v44
    %v214 = vmul.f32 %v212, %v45
    %v215 = vsel %vm57, %v213, 0.0
    %v216 = vrot.slane %v215, 4
    %v217 = vadd.f32 %v215, %v216
    %v218 = vrot.slane %v217, 2
    %v219 = vadd.f32 %v217, %v218
    %v220 = vrot.slane %v219, 1
    %v221 = vadd.f32 %v219, %v220
    %v222 = vsel %vm57, %v214, 0.0
    %v223 = vrot.slane %v222, 4
    %v224 = vadd.f32 %v222, %v223
    %v225 = vrot.slane %v224, 2
    %v226 = vadd.f32 %v224, %v225
    %v227 = vrot.slane %v226, 1
    %v228 = vadd.f32 %v226, %v227
    %v229 = vld [vmem:[#allocation2] sm:$0xff]
    %v230 = vld [vmem:[#allocation2 + $0x8] sm:$0xff]
    %v231 = vld [vmem:[#allocation2 + $0x10] sm:$0xff]
    %v232 = vld [vmem:[#allocation2 + $0x18] sm:$0xff]
    %v233 = vld [vmem:[%s4 + $0x1] sm:$0x1]
    %v234 = vlaneseq
    %v235 = vshrl.u32 %v234, 7
    %v236 = vsub.s32 0, %v235
    %v237 = vrot.slane %v233, %v236
    %v238 = vmul.f32 %v139, %v237
    %v239 = vmul.f32 %v140, %v237
    %v240 = vsel %vm163, %v238, 0.0
    %241 = vadd.xlane.f32.xlu0 %v240
    %v242 = vpop.xlane.xlu0 %241
    %v243 = vsel %vm163, %v239, 0.0
    %244 = vadd.xlane.f32.xlu0 %v243
    %v245 = vpop.xlane.xlu0 %244
    %247 = vrot.lane.b32.xlu0 %v170, 127
    %v248 = vpop.permute.xlu0 %247
    %s250 = vtos %v248
    %v251 = vstv %s250
    %v252 = vadd.f32 %v242, %v251
    %v253 = vadd.f32 %v245, %v251
    %v254 = vsel %vm175, -1e+09, %v252
    %v255 = vsel %vm176, -1e+09, %v253
    %v256 = vrot.slane %v254, 4
    %v257 = vmax.f32 %v254, %v256
    %v258 = vrot.slane %v257, 2
    %v259 = vmax.f32 %v257, %v258
    %v260 = vrot.slane %v259, 1
    %v261 = vmax.f32 %v259, %v260
    %v262 = vrot.slane %v255, 4
    %v263 = vmax.f32 %v255, %v262
    %v264 = vrot.slane %v263, 2
    %v265 = vmax.f32 %v263, %v264
    %v266 = vrot.slane %v265, 1
    %v267 = vmax.f32 %v265, %v266
    %v268 = vsub.f32 %v254, %v261
    %v269 = vsub.f32 %v255, %v267
    %v270 = vmul.f32 %v268, 1.442695
    %v271 = vpow.pop %v270
    %v272 = vmul.f32 %v269, 1.442695
    %v273 = vpow.pop %v272
    %v274 = vrot.slane %v271, 4
    %v275 = vadd.f32 %v271, %v274
    %v276 = vrot.slane %v275, 2
    %v277 = vadd.f32 %v275, %v276
    %v278 = vrot.slane %v277, 1
    %v279 = vadd.f32 %v277, %v278
    %v280 = vrot.slane %v273, 4
    %v281 = vadd.f32 %v273, %v280
    %v282 = vrot.slane %v281, 2
    %v283 = vadd.f32 %v281, %v282
    %v284 = vrot.slane %v283, 1
    %v285 = vadd.f32 %v283, %v284
    %v286 = vrcp.pop %v279
    %v287 = vrcp.pop %v285
    %v288 = vmul.f32 %v271, %v286
    %v289 = vmul.f32 %v273, %v287
    %v290 = vmul.f32 %v288, %v44
    %v291 = vmul.f32 %v289, %v45
    %v292 = vsel %vm57, %v290, 0.0
    %v293 = vrot.slane %v292, 4
    %v294 = vadd.f32 %v292, %v293
    %v295 = vrot.slane %v294, 2
    %v296 = vadd.f32 %v294, %v295
    %v297 = vrot.slane %v296, 1
    %v298 = vadd.f32 %v296, %v297
    %v299 = vsel %vm57, %v291, 0.0
    %v300 = vrot.slane %v299, 4
    %v301 = vadd.f32 %v299, %v300
    %v302 = vrot.slane %v301, 2
    %v303 = vadd.f32 %v301, %v302
    %v304 = vrot.slane %v303, 1
    %v305 = vadd.f32 %v303, %v304
    %v306 = vld [vmem:[#allocation2 + $0x20] sm:$0xff]
    %v307 = vld [vmem:[#allocation2 + $0x28] sm:$0xff]
    %v308 = vld [vmem:[#allocation2 + $0x30] sm:$0xff]
    %v309 = vld [vmem:[#allocation2 + $0x38] sm:$0xff]
    %vm312 = vcmask 1041409
    %v313 = vsel %vm312, %v305, %v298
    %v314 = vsel %vm57, %v313, 0
    %316 = vmatprep.subr.mxu0 0.0
    %317 = vmatpush1.msra.mxu0 0.0
    %318 = vmatprep.subr.mxu0 0.0
    %319 = vmatpush1.msra.mxu0 0.0
    %320 = vmatprep.subr.mxu0 0.0
    %321 = vmatpush1.msra.mxu0 0.0
    %322 = vmatprep.subr.mxu0 0.0
    %323 = vmatpush1.msra.mxu0 0.0
    %324 = vmatprep.subr.mxu0 0.0
    %325 = vmatpush1.msra.mxu0 0.0
    %326 = vmatprep.subr.mxu0 0.0
    %327 = vmatpush1.msra.mxu0 0.0
    %328 = vmatprep.subr.mxu0 0.0
    %329 = vmatpush1.msra.mxu0 0.0
    %330 = vmatprep.subr.mxu0 0.0
    %331 = vmatpush1.msra.mxu0 0.0
    %332 = vmatprep.subr.mxu0 0.0
    %333 = vmatpush1.msra.mxu0 0.0
    %334 = vmatprep.subr.mxu0 0.0
    %335 = vmatpush1.msra.mxu0 0.0
    %336 = vmatprep.subr.mxu0 0.0
    %337 = vmatpush1.msra.mxu0 0.0
    %338 = vmatprep.subr.mxu0 0.0
    %339 = vmatpush1.msra.mxu0 0.0
    %340 = vmatprep.subr.mxu0 0.0
    %341 = vmatpush1.msra.mxu0 %v309
    %342 = vmatprep.subr.mxu0 0.0
    %343 = vmatpush1.msra.mxu0 %v308
    %344 = vmatprep.subr.mxu0 0.0
    %345 = vmatpush1.msra.mxu0 %v307
    %346 = vmatprep.subr.mxu0 0.0
    %347 = vmatpush1.msra.mxu0 %v306
    %348 = vmatprep.subr.mxu0 0.0
    %349 = vmatpush2.msra.mxu0 0.0
    %350 = vmatprep.subr.mxu0 0.0
    %351 = vmatpush2.msra.mxu0 0.0
    %352 = vmatprep.subr.mxu0 0.0
    %353 = vmatpush2.msra.mxu0 0.0
    %354 = vmatprep.subr.mxu0 0.0
    %355 = vmatpush2.msra.mxu0 0.0
    %356 = vmatprep.subr.mxu0 0.0
    %357 = vmatpush2.msra.mxu0 0.0
    %358 = vmatprep.subr.mxu0 0.0
    %359 = vmatpush2.msra.mxu0 0.0
    %360 = vmatprep.subr.mxu0 0.0
    %361 = vmatpush2.msra.mxu0 0.0
    %362 = vmatprep.subr.mxu0 0.0
    %363 = vmatpush2.msra.mxu0 0.0
    %364 = vmatprep.subr.mxu0 0.0
    %365 = vmatpush2.msra.mxu0 0.0
    %366 = vmatprep.subr.mxu0 0.0
    %367 = vmatpush2.msra.mxu0 0.0
    %368 = vmatprep.subr.mxu0 0.0
    %369 = vmatpush2.msra.mxu0 0.0
    %370 = vmatprep.subr.mxu0 0.0
    %371 = vmatpush2.msra.mxu0 0.0
    %372 = vmatprep.subr.mxu0 0.0
    %373 = vmatpush2.msra.mxu0 0.0
    %374 = vmatprep.subr.mxu0 0.0
    %375 = vmatpush2.msra.mxu0 0.0
    %376 = vmatprep.subr.mxu0 0.0
    %377 = vmatpush2.msra.mxu0 0.0
    %378 = vmatprep.subr.mxu0 0.0
    %379 = vmatpush2.msra.mxu0 0.0
    %380 = vmatprep.mubr.f32.mxu0 0.0
    %381 = vmatmul.mubr.f32.gmra.mxu0 %v314
    %v382 = vpop.f32.mrf.mxu0
    %v383 = vadd.f32 0.0, %v382
    %v384 = vpop.f32.mrf.mxu0
    %385 = vdwg.mxu0
    %v388 = vsel %vm312, %v228, %v221
    %v389 = vsel %vm57, %v388, 0
    %391 = vmatprep.subr.mxu0 0.0
    %392 = vmatpush1.msra.mxu0 0.0
    %393 = vmatprep.subr.mxu0 0.0
    %394 = vmatpush1.msra.mxu0 0.0
    %395 = vmatprep.subr.mxu0 0.0
    %396 = vmatpush1.msra.mxu0 0.0
    %397 = vmatprep.subr.mxu0 0.0
    %398 = vmatpush1.msra.mxu0 0.0
    %399 = vmatprep.subr.mxu0 0.0
    %400 = vmatpush1.msra.mxu0 0.0
    %401 = vmatprep.subr.mxu0 0.0
    %402 = vmatpush1.msra.mxu0 0.0
    %403 = vmatprep.subr.mxu0 0.0
    %404 = vmatpush1.msra.mxu0 0.0
    %405 = vmatprep.subr.mxu0 0.0
    %406 = vmatpush1.msra.mxu0 0.0
    %407 = vmatprep.subr.mxu0 0.0
    %408 = vmatpush1.msra.mxu0 0.0
    %409 = vmatprep.subr.mxu0 0.0
    %410 = vmatpush1.msra.mxu0 0.0
    %411 = vmatprep.subr.mxu0 0.0
    %412 = vmatpush1.msra.mxu0 0.0
    %413 = vmatprep.subr.mxu0 0.0
    %414 = vmatpush1.msra.mxu0 0.0
    %415 = vmatprep.subr.mxu0 0.0
    %416 = vmatpush1.msra.mxu0 %v232
    %417 = vmatprep.subr.mxu0 0.0
    %418 = vmatpush1.msra.mxu0 %v231
    %419 = vmatprep.subr.mxu0 0.0
    %420 = vmatpush1.msra.mxu0 %v230
    %421 = vmatprep.subr.mxu0 0.0
    %422 = vmatpush1.msra.mxu0 %v229
    %423 = vmatprep.subr.mxu0 0.0
    %424 = vmatpush2.msra.mxu0 0.0
    %425 = vmatprep.subr.mxu0 0.0
    %426 = vmatpush2.msra.mxu0 0.0
    %427 = vmatprep.subr.mxu0 0.0
    %428 = vmatpush2.msra.mxu0 0.0
    %429 = vmatprep.subr.mxu0 0.0
    %430 = vmatpush2.msra.mxu0 0.0
    %431 = vmatprep.subr.mxu0 0.0
    %432 = vmatpush2.msra.mxu0 0.0
    %433 = vmatprep.subr.mxu0 0.0
    %434 = vmatpush2.msra.mxu0 0.0
    %435 = vmatprep.subr.mxu0 0.0
    %436 = vmatpush2.msra.mxu0 0.0
    %437 = vmatprep.subr.mxu0 0.0
    %438 = vmatpush2.msra.mxu0 0.0
    %439 = vmatprep.subr.mxu0 0.0
    %440 = vmatpush2.msra.mxu0 0.0
    %441 = vmatprep.subr.mxu0 0.0
    %442 = vmatpush2.msra.mxu0 0.0
    %443 = vmatprep.subr.mxu0 0.0
    %444 = vmatpush2.msra.mxu0 0.0
    %445 = vmatprep.subr.mxu0 0.0
    %446 = vmatpush2.msra.mxu0 0.0
    %447 = vmatprep.subr.mxu0 0.0
    %448 = vmatpush2.msra.mxu0 0.0
    %449 = vmatprep.subr.mxu0 0.0
    %450 = vmatpush2.msra.mxu0 0.0
    %451 = vmatprep.subr.mxu0 0.0
    %452 = vmatpush2.msra.mxu0 0.0
    %453 = vmatprep.subr.mxu0 0.0
    %454 = vmatpush2.msra.mxu0 0.0
    %455 = vmatprep.mubr.f32.mxu0 0.0
    %456 = vmatmul.mubr.f32.gmra.mxu0 %v389
    %v457 = vpop.f32.mrf.mxu0
    %v458 = vadd.f32 %v383, %v457
    %v459 = vpop.f32.mrf.mxu0
    %460 = vdwg.mxu0
    %v461 = vld [vmem:[%s7] sm:$0x1]
    %v463 = vlaneseq
    %v464 = vshrl.u32 %v463, 7
    %v465 = vsub.s32 0, %v464
    %v466 = vrot.slane %v461, %v465
    %v468 = vadd.f32 %v458, %v466
    %vm469 = vcmask 517120
    %470 = vst.msk [vmem:[#allocation5] sm:$0x3] %vm469, %v468
    // Predicated region
    $region38: #{tpu_custom_call.1} parent=1 // pred_check
      _
    $region39: #{tpu_custom_call.1} parent=1 // pred_check_branch
      %472 = sbr.rel (0) target = $region41
    $region40: #{tpu_custom_call.1} parent=1 // pred_region
      %s474 = ssub.s32 32, 32
      %475 = vsyncadd [#allocation4], %s474
      %s477 = sshll.u32 [#allocation5], 4
      %s478 = int_to_ptr.vmem [resolvable:$true] %s477
      %480 = dma.vmem_to_hbm [thread:$0]  %s478, 32, %s8, [#allocation4]
    $region41: #{tpu_custom_call.1} parent=1 // pred_fallthru
      _
    // Predicated region
    $region42: #{tpu_custom_call.1} parent=1 // pred_check
      _
    $region43: #{tpu_custom_call.1} parent=1 // pred_check_branch
      %482 = sbr.rel (0) target = $region45
    $region44: #{tpu_custom_call.1} parent=1 // pred_region
      %483 = dma.done [#allocation4], 32
    $region45: #{tpu_custom_call.1} parent=1 // pred_fallthru
      _
    %484 = vsyncpa [#allocation3], 1
    %485 = vsyncpa [#allocation4], 1

// kernel: tpu_custom_call.1
$region0: #{tpu_custom_call.1}
  #allocation0 [shape = 'u32[]', space=smem, size = 0x4, offset = 0x4, fixed_abs, tag = 'smem constant byte address 0x4 - core index']
  #allocation1 [shape = 'u32[144,128]{1,0:T(1,128)}', space=vmem, size = 0x12000, scoped, tag = 'internal scratch']
  %s0 = inlined_call_operand.vmem [shape: f32[2,8,32], index: 0, kind: input, shape index: {}]
  %s1 = inlined_call_operand.vmem [shape: f32[2,8], index: 1, kind: input, shape index: {}]
  %s2 = inlined_call_operand.vmem [shape: f32[32,16], index: 2, kind: input, shape index: {}]
  %s3 = inlined_call_operand.vmem [shape: f32[1,16], index: 3, kind: input, shape index: {}]
  %s4 = inlined_call_operand.vmem [shape: f32[2,16], index: 4, kind: input, shape index: {}]
  %s5 = inlined_call_operand.vmem [shape: f32[1,2], index: 5, kind: input, shape index: {}]
  %s6 = inlined_call_operand.hbm [shape: f32[64,64], index: 6, kind: input, shape index: {}]
  %s7 = inlined_call_operand.vmem [shape: f32[1,64], index: 7, kind: input, shape index: {}]
  %s8 = inlined_call_operand.hbm [shape: f32[2,64], index: 8, kind: output, shape index: {}]
  %s9 = sld [smem:[#allocation0]]
  $region46: #{tpu_custom_call.1} parent=0
    _
  %s11 = ssub.s32 1, %s9
  %s12 = scalar_select 0, %s11, %s9
  $region1: #{tpu_custom_call.1} parent=0
    #allocation2 [shape = 'u8[32768]{0}', space=vmem, size = 0x8000, scoped, tag = 'input window, operand 6, single buffered']
    #allocation3 [shape = 's32[1]{0}', space=sflag, size = 0x4, scoped, tag = 'scoped memory for tpu_custom_call.1']
    #allocation4 [shape = 's32[1]{0}', space=sflag, size = 0x4, scoped, tag = 'scoped memory for tpu_custom_call.1']
    #allocation5 [shape = 'u8[1024]{0}', space=vmem, size = 0x400, scoped, tag = 'output window, operand 0, single buffered']
    %13 = vsyncpa [#allocation3], 0
    %14 = vsyncpa [#allocation4], 0
    // Predicated region
    $region2: #{tpu_custom_call.1} parent=1 // pred_check
      _
    $region3: #{tpu_custom_call.1} parent=1 // pred_check_branch
      %16 = sbr.rel (0) target = $region5
    $region4: #{tpu_custom_call.1} parent=1 // pred_region
      _
    $region5: #{tpu_custom_call.1} parent=1 // pred_fallthru
      _
    // Predicated region
    $region6: #{tpu_custom_call.1} parent=1 // pred_check
      _
    $region7: #{tpu_custom_call.1} parent=1 // pred_check_branch
      %18 = sbr.rel (0) target = $region9
    $region8: #{tpu_custom_call.1} parent=1 // pred_region
      _
    $region9: #{tpu_custom_call.1} parent=1 // pred_fallthru
      _
    // Predicated region
    $region10: #{tpu_custom_call.1} parent=1 // pred_check
      _
    $region11: #{tpu_custom_call.1} parent=1 // pred_check_branch
      %20 = sbr.rel (0) target = $region13
    $region12: #{tpu_custom_call.1} parent=1 // pred_region
      _
    $region13: #{tpu_custom_call.1} parent=1 // pred_fallthru
      _
    // Predicated region
    $region14: #{tpu_custom_call.1} parent=1 // pred_check
      _
    $region15: #{tpu_custom_call.1} parent=1 // pred_check_branch
      %22 = sbr.rel (0) target = $region17
    $region16: #{tpu_custom_call.1} parent=1 // pred_region
      _
    $region17: #{tpu_custom_call.1} parent=1 // pred_fallthru
      _
    // Predicated region
    $region18: #{tpu_custom_call.1} parent=1 // pred_check
      _
    $region19: #{tpu_custom_call.1} parent=1 // pred_check_branch
      %24 = sbr.rel (0) target = $region21
    $region20: #{tpu_custom_call.1} parent=1 // pred_region
      _
    $region21: #{tpu_custom_call.1} parent=1 // pred_fallthru
      _
    // Predicated region
    $region22: #{tpu_custom_call.1} parent=1 // pred_check
      _
    $region23: #{tpu_custom_call.1} parent=1 // pred_check_branch
      %26 = sbr.rel (0) target = $region25
    $region24: #{tpu_custom_call.1} parent=1 // pred_region
      _
    $region25: #{tpu_custom_call.1} parent=1 // pred_fallthru
      _
    // Predicated region
    $region26: #{tpu_custom_call.1} parent=1 // pred_check
      _
    $region27: #{tpu_custom_call.1} parent=1 // pred_check_branch
      %28 = sbr.rel (0) target = $region29
    $region28: #{tpu_custom_call.1} parent=1 // pred_region
      %s30 = ssub.s32 1024, 1024
      %31 = vsyncadd [#allocation3], %s30
      %s32 = sshll.u32 [#allocation2], 4
      %s33 = int_to_ptr.vmem [resolvable:$true] %s32
      %38 = dma.hbm_to_vmem [thread:$0]  %s6, 1024, %s33, [#allocation3], 128, 128, 8
    $region29: #{tpu_custom_call.1} parent=1 // pred_fallthru
      _
    // Predicated region
    $region30: #{tpu_custom_call.1} parent=1 // pred_check
      _
    $region31: #{tpu_custom_call.1} parent=1 // pred_check_branch
      %40 = sbr.rel (0) target = $region33
    $region32: #{tpu_custom_call.1} parent=1 // pred_region
      _
    $region33: #{tpu_custom_call.1} parent=1 // pred_fallthru
      _
    // Predicated region
    $region34: #{tpu_custom_call.1} parent=1 // pred_check
      _
    $region35: #{tpu_custom_call.1} parent=1 // pred_check_branch
      %42 = sbr.rel (0) target = $region37
    $region36: #{tpu_custom_call.1} parent=1 // pred_region
      %43 = dma.done [#allocation3], 1024
    $region37: #{tpu_custom_call.1} parent=1 // pred_fallthru
      _
    %v44 = vld [vmem:[%s0] sm:$0xff]
    %v45 = vld [vmem:[%s0 + $0x8] sm:$0xff]
    %v46 = vld [vmem:[%s2] sm:$0xff]
    %v47 = vld [vmem:[%s2 + $0x8] sm:$0xff]
    %v48 = vld [vmem:[%s2 + $0x10] sm:$0xff]
    %v49 = vld [vmem:[%s2 + $0x18] sm:$0xff]
    %v50 = vld [vmem:[%s3] sm:$0x1]
    %v52 = vlaneseq
    %v53 = vshrl.u32 %v52, 7
    %v54 = vsub.s32 0, %v53
    %v55 = vrot.slane %v50, %v54
    %vm57 = vcmask 261120
    %v59 = vsel %vm57, %v44, 0
    %v62 = vsel %vm57, %v45, 0
    %64 = vmatprep.subr.mxu0 0.0
    %65 = vmatpush1.msra.mxu0 0.0
    %66 = vmatprep.subr.mxu0 0.0
    %67 = vmatpush1.msra.mxu0 0.0
    %68 = vmatprep.subr.mxu0 0.0
    %69 = vmatpush1.msra.mxu0 0.0
    %70 = vmatprep.subr.mxu0 0.0
    %71 = vmatpush1.msra.mxu0 0.0
    %72 = vmatprep.subr.mxu0 0.0
    %73 = vmatpush1.msra.mxu0 0.0
    %74 = vmatprep.subr.mxu0 0.0
    %75 = vmatpush1.msra.mxu0 0.0
    %76 = vmatprep.subr.mxu0 0.0
    %77 = vmatpush1.msra.mxu0 0.0
    %78 = vmatprep.subr.mxu0 0.0
    %79 = vmatpush1.msra.mxu0 0.0
    %80 = vmatprep.subr.mxu0 0.0
    %81 = vmatpush1.msra.mxu0 0.0
    %82 = vmatprep.subr.mxu0 0.0
    %83 = vmatpush1.msra.mxu0 0.0
    %84 = vmatprep.subr.mxu0 0.0
    %85 = vmatpush1.msra.mxu0 0.0
    %86 = vmatprep.subr.mxu0 0.0
    %87 = vmatpush1.msra.mxu0 0.0
    %88 = vmatprep.subr.mxu0 0.0
    %89 = vmatpush1.msra.mxu0 %v49
    %90 = vmatprep.subr.mxu0 0.0
    %91 = vmatpush1.msra.mxu0 %v48
    %92 = vmatprep.subr.mxu0 0.0
    %93 = vmatpush1.msra.mxu0 %v47
    %94 = vmatprep.subr.mxu0 0.0
    %95 = vmatpush1.msra.mxu0 %v46
    %96 = vmatprep.subr.mxu0 0.0
    %97 = vmatpush2.msra.mxu0 0.0
    %98 = vmatprep.subr.mxu0 0.0
    %99 = vmatpush2.msra.mxu0 0.0
    %100 = vmatprep.subr.mxu0 0.0
    %101 = vmatpush2.msra.mxu0 0.0
    %102 = vmatprep.subr.mxu0 0.0
    %103 = vmatpush2.msra.mxu0 0.0
    %104 = vmatprep.subr.mxu0 0.0
    %105 = vmatpush2.msra.mxu0 0.0
    %106 = vmatprep.subr.mxu0 0.0
    %107 = vmatpush2.msra.mxu0 0.0
    %108 = vmatprep.subr.mxu0 0.0
    %109 = vmatpush2.msra.mxu0 0.0
    %110 = vmatprep.subr.mxu0 0.0
    %111 = vmatpush2.msra.mxu0 0.0
    %112 = vmatprep.subr.mxu0 0.0
    %113 = vmatpush2.msra.mxu0 0.0
    %114 = vmatprep.subr.mxu0 0.0
    %115 = vmatpush2.msra.mxu0 0.0
    %116 = vmatprep.subr.mxu0 0.0
    %117 = vmatpush2.msra.mxu0 0.0
    %118 = vmatprep.subr.mxu0 0.0
    %119 = vmatpush2.msra.mxu0 0.0
    %120 = vmatprep.subr.mxu0 0.0
    %121 = vmatpush2.msra.mxu0 0.0
    %122 = vmatprep.subr.mxu0 0.0
    %123 = vmatpush2.msra.mxu0 0.0
    %124 = vmatprep.subr.mxu0 0.0
    %125 = vmatpush2.msra.mxu0 0.0
    %126 = vmatprep.subr.mxu0 0.0
    %127 = vmatpush2.msra.mxu0 0.0
    %128 = vmatprep.mubr.f32.mxu0 0.0
    %129 = vmatmul.mubr.f32.gmra.mxu0 %v59
    %v130 = vpop.f32.mrf.mxu0
    %v131 = vadd.f32 %v55, %v130
    %v132 = vpop.f32.mrf.mxu0
    %133 = vmatprep.mubr.f32.mxu0 0.0
    %134 = vmatmul.mubr.f32.gmra.mxu0 %v62
    %v135 = vpop.f32.mrf.mxu0
    %v136 = vadd.f32 %v55, %v135
    %v137 = vpop.f32.mrf.mxu0
    %138 = vdwg.mxu0
    %v139 = vmax.f32 %v131, 0.0
    %v140 = vmax.f32 %v136, 0.0
    %v141 = vld [vmem:[%s1] sm:$0x3]
    %v142 = vlaneseq
    %v143 = vshrl.u32 %v142, 7
    %v144 = vsub.s32 0, %v143
    %v145 = vrot.slane %v141, %v144
    %147 = vbcast.lane.b32.xlu0 %v145, 256
    %v148 = vpop.permute.xlu0 %147
    %v149 = vlaneseq
    %v150 = vshrl.u32 %v149, 7
    %v151 = vsub.s32 1, %v150
    %v152 = vrot.slane %v141, %v151
    %154 = vbcast.lane.b32.xlu0 %v152, 256
    %v155 = vpop.permute.xlu0 %154
    %v156 = vld [vmem:[%s4] sm:$0x1]
    %v157 = vlaneseq
    %v158 = vshrl.u32 %v157, 7
    %v159 = vsub.s32 0, %v158
    %v160 = vrot.slane %v156, %v159
    %v161 = vmul.f32 %v139, %v160
    %v162 = vmul.f32 %v140, %v160
    %vm163 = vcmask 130048
    %v164 = vsel %vm163, %v161, 0.0
    %165 = vadd.xlane.f32.xlu0 %v164
    %v166 = vpop.xlane.xlu0 %165
    %v167 = vsel %vm163, %v162, 0.0
    %168 = vadd.xlane.f32.xlu0 %v167
    %v169 = vpop.xlane.xlu0 %168
    %v170 = vld [vmem:[%s5] sm:$0x1]
    %s171 = vtos %v170
    %v172 = vstv %s171
    %v173 = vadd.f32 %v166, %v172
    %v174 = vadd.f32 %v169, %v172
    %vm175 = vcmp.gt.f32.partialorder %v148, 0.0
    %vm176 = vcmp.gt.f32.partialorder %v155, 0.0
    %v177 = vsel %vm175, -1e+09, %v173
    %v178 = vsel %vm176, -1e+09, %v174
    %v179 = vrot.slane %v177, 4
    %v180 = vmax.f32 %v177, %v179
    %v181 = vrot.slane %v180, 2
    %v182 = vmax.f32 %v180, %v181
    %v183 = vrot.slane %v182, 1
    %v184 = vmax.f32 %v182, %v183
    %v185 = vrot.slane %v178, 4
    %v186 = vmax.f32 %v178, %v185
    %v187 = vrot.slane %v186, 2
    %v188 = vmax.f32 %v186, %v187
    %v189 = vrot.slane %v188, 1
    %v190 = vmax.f32 %v188, %v189
    %v191 = vsub.f32 %v177, %v184
    %v192 = vsub.f32 %v178, %v190
    %v193 = vmul.f32 %v191, 1.442695
    %v194 = vpow.pop %v193
    %v195 = vmul.f32 %v192, 1.442695
    %v196 = vpow.pop %v195
    %v197 = vrot.slane %v194, 4
    %v198 = vadd.f32 %v194, %v197
    %v199 = vrot.slane %v198, 2
    %v200 = vadd.f32 %v198, %v199
    %v201 = vrot.slane %v200, 1
    %v202 = vadd.f32 %v200, %v201
    %v203 = vrot.slane %v196, 4
    %v204 = vadd.f32 %v196, %v203
    %v205 = vrot.slane %v204, 2
    %v206 = vadd.f32 %v204, %v205
    %v207 = vrot.slane %v206, 1
    %v208 = vadd.f32 %v206, %v207
    %v209 = vrcp.pop %v202
    %v210 = vrcp.pop %v208
    %v211 = vmul.f32 %v194, %v209
    %v212 = vmul.f32 %v196, %v210
    %v213 = vmul.f32 %v211, %v44
    %v214 = vmul.f32 %v212, %v45
    %v215 = vsel %vm57, %v213, 0.0
    %v216 = vrot.slane %v215, 4
    %v217 = vadd.f32 %v215, %v216
    %v218 = vrot.slane %v217, 2
    %v219 = vadd.f32 %v217, %v218
    %v220 = vrot.slane %v219, 1
    %v221 = vadd.f32 %v219, %v220
    %v222 = vsel %vm57, %v214, 0.0
    %v223 = vrot.slane %v222, 4
    %v224 = vadd.f32 %v222, %v223
    %v225 = vrot.slane %v224, 2
    %v226 = vadd.f32 %v224, %v225
    %v227 = vrot.slane %v226, 1
    %v228 = vadd.f32 %v226, %v227
    %v229 = vld [vmem:[#allocation2] sm:$0xff]
    %v230 = vld [vmem:[#allocation2 + $0x8] sm:$0xff]
    %v231 = vld [vmem:[#allocation2 + $0x10] sm:$0xff]
    %v232 = vld [vmem:[#allocation2 + $0x18] sm:$0xff]
    %v233 = vld [vmem:[%s4 + $0x1] sm:$0x1]
    %v234 = vlaneseq
    %v235 = vshrl.u32 %v234, 7
    %v236 = vsub.s32 0, %v235
    %v237 = vrot.slane %v233, %v236
    %v238 = vmul.f32 %v139, %v237
    %v239 = vmul.f32 %v140, %v237
    %v240 = vsel %vm163, %v238, 0.0
    %241 = vadd.xlane.f32.xlu0 %v240
    %v242 = vpop.xlane.xlu0 %241
    %v243 = vsel %vm163, %v239, 0.0
    %244 = vadd.xlane.f32.xlu0 %v243
    %v245 = vpop.xlane.xlu0 %244
    %247 = vrot.lane.b32.xlu0 %v170, 127
    %v248 = vpop.permute.xlu0 %247
    %s250 = vtos %v248
    %v251 = vstv %s250
    %v252 = vadd.f32 %v242, %v251
    %v253 = vadd.f32 %v245, %v251
    %v254 = vsel %vm175, -1e+09, %v252
    %v255 = vsel %vm176, -1e+09, %v253
    %v256 = vrot.slane %v254, 4
    %v257 = vmax.f32 %v254, %v256
    %v258 = vrot.slane %v257, 2
    %v259 = vmax.f32 %v257, %v258
    %v260 = vrot.slane %v259, 1
    %v261 = vmax.f32 %v259, %v260
    %v262 = vrot.slane %v255, 4
    %v263 = vmax.f32 %v255, %v262
    %v264 = vrot.slane %v263, 2
    %v265 = vmax.f32 %v263, %v264
    %v266 = vrot.slane %v265, 1
    %v267 = vmax.f32 %v265, %v266
    %v268 = vsub.f32 %v254, %v261
    %v269 = vsub.f32 %v255, %v267
    %v270 = vmul.f32 %v268, 1.442695
    %v271 = vpow.pop %v270
    %v272 = vmul.f32 %v269, 1.442695
    %v273 = vpow.pop %v272
    %v274 = vrot.slane %v271, 4
    %v275 = vadd.f32 %v271, %v274
    %v276 = vrot.slane %v275, 2
    %v277 = vadd.f32 %v275, %v276
    %v278 = vrot.slane %v277, 1
    %v279 = vadd.f32 %v277, %v278
    %v280 = vrot.slane %v273, 4
    %v281 = vadd.f32 %v273, %v280
    %v282 = vrot.slane %v281, 2
    %v283 = vadd.f32 %v281, %v282
    %v284 = vrot.slane %v283, 1
    %v285 = vadd.f32 %v283, %v284
    %v286 = vrcp.pop %v279
    %v287 = vrcp.pop %v285
    %v288 = vmul.f32 %v271, %v286
    %v289 = vmul.f32 %v273, %v287
    %v290 = vmul.f32 %v288, %v44
    %v291 = vmul.f32 %v289, %v45
    %v292 = vsel %vm57, %v290, 0.0
    %v293 = vrot.slane %v292, 4
    %v294 = vadd.f32 %v292, %v293
    %v295 = vrot.slane %v294, 2
    %v296 = vadd.f32 %v294, %v295
    %v297 = vrot.slane %v296, 1
    %v298 = vadd.f32 %v296, %v297
    %v299 = vsel %vm57, %v291, 0.0
    %v300 = vrot.slane %v299, 4
    %v301 = vadd.f32 %v299, %v300
    %v302 = vrot.slane %v301, 2
    %v303 = vadd.f32 %v301, %v302
    %v304 = vrot.slane %v303, 1
    %v305 = vadd.f32 %v303, %v304
    %v306 = vld [vmem:[#allocation2 + $0x20] sm:$0xff]
    %v307 = vld [vmem:[#allocation2 + $0x28] sm:$0xff]
    %v308 = vld [vmem:[#allocation2 + $0x30] sm:$0xff]
    %v309 = vld [vmem:[#allocation2 + $0x38] sm:$0xff]
    %vm312 = vcmask 1041409
    %v313 = vsel %vm312, %v305, %v298
    %v314 = vsel %vm57, %v313, 0
    %316 = vmatprep.subr.mxu0 0.0
    %317 = vmatpush1.msra.mxu0 0.0
    %318 = vmatprep.subr.mxu0 0.0
    %319 = vmatpush1.msra.mxu0 0.0
    %320 = vmatprep.subr.mxu0 0.0
    %321 = vmatpush1.msra.mxu0 0.0
    %322 = vmatprep.subr.mxu0 0.0
    %323 = vmatpush1.msra.mxu0 0.0
    %324 = vmatprep.subr.mxu0 0.0
    %325 = vmatpush1.msra.mxu0 0.0
    %326 = vmatprep.subr.mxu0 0.0
    %327 = vmatpush1.msra.mxu0 0.0
    %328 = vmatprep.subr.mxu0 0.0
    %329 = vmatpush1.msra.mxu0 0.0
    %330 = vmatprep.subr.mxu0 0.0
    %331 = vmatpush1.msra.mxu0 0.0
    %332 = vmatprep.subr.mxu0 0.0
    %333 = vmatpush1.msra.mxu0 0.0
    %334 = vmatprep.subr.mxu0 0.0
    %335 = vmatpush1.msra.mxu0 0.0
    %336 = vmatprep.subr.mxu0 0.0
    %337 = vmatpush1.msra.mxu0 0.0
    %338 = vmatprep.subr.mxu0 0.0
    %339 = vmatpush1.msra.mxu0 0.0
    %340 = vmatprep.subr.mxu0 0.0
    %341 = vmatpush1.msra.mxu0 %v309
    %342 = vmatprep.subr.mxu0 0.0
    %343 = vmatpush1.msra.mxu0 %v308
    %344 = vmatprep.subr.mxu0 0.0
    %345 = vmatpush1.msra.mxu0 %v307
    %346 = vmatprep.subr.mxu0 0.0
    %347 = vmatpush1.msra.mxu0 %v306
    %348 = vmatprep.subr.mxu0 0.0
    %349 = vmatpush2.msra.mxu0 0.0
    %350 = vmatprep.subr.mxu0 0.0
    %351 = vmatpush2.msra.mxu0 0.0
    %352 = vmatprep.subr.mxu0 0.0
    %353 = vmatpush2.msra.mxu0 0.0
    %354 = vmatprep.subr.mxu0 0.0
    %355 = vmatpush2.msra.mxu0 0.0
    %356 = vmatprep.subr.mxu0 0.0
    %357 = vmatpush2.msra.mxu0 0.0
    %358 = vmatprep.subr.mxu0 0.0
    %359 = vmatpush2.msra.mxu0 0.0
    %360 = vmatprep.subr.mxu0 0.0
    %361 = vmatpush2.msra.mxu0 0.0
    %362 = vmatprep.subr.mxu0 0.0
    %363 = vmatpush2.msra.mxu0 0.0
    %364 = vmatprep.subr.mxu0 0.0
    %365 = vmatpush2.msra.mxu0 0.0
    %366 = vmatprep.subr.mxu0 0.0
    %367 = vmatpush2.msra.mxu0 0.0
    %368 = vmatprep.subr.mxu0 0.0
    %369 = vmatpush2.msra.mxu0 0.0
    %370 = vmatprep.subr.mxu0 0.0
    %371 = vmatpush2.msra.mxu0 0.0
    %372 = vmatprep.subr.mxu0 0.0
    %373 = vmatpush2.msra.mxu0 0.0
    %374 = vmatprep.subr.mxu0 0.0
    %375 = vmatpush2.msra.mxu0 0.0
    %376 = vmatprep.subr.mxu0 0.0
    %377 = vmatpush2.msra.mxu0 0.0
    %378 = vmatprep.subr.mxu0 0.0
    %379 = vmatpush2.msra.mxu0 0.0
    %380 = vmatprep.mubr.f32.mxu0 0.0
    %381 = vmatmul.mubr.f32.gmra.mxu0 %v314
    %v382 = vpop.f32.mrf.mxu0
    %v383 = vadd.f32 0.0, %v382
    %v384 = vpop.f32.mrf.mxu0
    %385 = vdwg.mxu0
    %v388 = vsel %vm312, %v228, %v221
    %v389 = vsel %vm57, %v388, 0
    %391 = vmatprep.subr.mxu0 0.0
    %392 = vmatpush1.msra.mxu0 0.0
    %393 = vmatprep.subr.mxu0 0.0
    %394 = vmatpush1.msra.mxu0 0.0
    %395 = vmatprep.subr.mxu0 0.0
    %396 = vmatpush1.msra.mxu0 0.0
    %397 = vmatprep.subr.mxu0 0.0
    %398 = vmatpush1.msra.mxu0 0.0
    %399 = vmatprep.subr.mxu0 0.0
    %400 = vmatpush1.msra.mxu0 0.0
    %401 = vmatprep.subr.mxu0 0.0
    %402 = vmatpush1.msra.mxu0 0.0
    %403 = vmatprep.subr.mxu0 0.0
    %404 = vmatpush1.msra.mxu0 0.0
    %405 = vmatprep.subr.mxu0 0.0
    %406 = vmatpush1.msra.mxu0 0.0
    %407 = vmatprep.subr.mxu0 0.0
    %408 = vmatpush1.msra.mxu0 0.0
    %409 = vmatprep.subr.mxu0 0.0
    %410 = vmatpush1.msra.mxu0 0.0
    %411 = vmatprep.subr.mxu0 0.0
    %412 = vmatpush1.msra.mxu0 0.0
    %413 = vmatprep.subr.mxu0 0.0
    %414 = vmatpush1.msra.mxu0 0.0
    %415 = vmatprep.subr.mxu0 0.0
    %416 = vmatpush1.msra.mxu0 %v232
    %417 = vmatprep.subr.mxu0 0.0
    %418 = vmatpush1.msra.mxu0 %v231
    %419 = vmatprep.subr.mxu0 0.0
    %420 = vmatpush1.msra.mxu0 %v230
    %421 = vmatprep.subr.mxu0 0.0
    %422 = vmatpush1.msra.mxu0 %v229
    %423 = vmatprep.subr.mxu0 0.0
    %424 = vmatpush2.msra.mxu0 0.0
    %425 = vmatprep.subr.mxu0 0.0
    %426 = vmatpush2.msra.mxu0 0.0
    %427 = vmatprep.subr.mxu0 0.0
    %428 = vmatpush2.msra.mxu0 0.0
    %429 = vmatprep.subr.mxu0 0.0
    %430 = vmatpush2.msra.mxu0 0.0
    %431 = vmatprep.subr.mxu0 0.0
    %432 = vmatpush2.msra.mxu0 0.0
    %433 = vmatprep.subr.mxu0 0.0
    %434 = vmatpush2.msra.mxu0 0.0
    %435 = vmatprep.subr.mxu0 0.0
    %436 = vmatpush2.msra.mxu0 0.0
    %437 = vmatprep.subr.mxu0 0.0
    %438 = vmatpush2.msra.mxu0 0.0
    %439 = vmatprep.subr.mxu0 0.0
    %440 = vmatpush2.msra.mxu0 0.0
    %441 = vmatprep.subr.mxu0 0.0
    %442 = vmatpush2.msra.mxu0 0.0
    %443 = vmatprep.subr.mxu0 0.0
    %444 = vmatpush2.msra.mxu0 0.0
    %445 = vmatprep.subr.mxu0 0.0
    %446 = vmatpush2.msra.mxu0 0.0
    %447 = vmatprep.subr.mxu0 0.0
    %448 = vmatpush2.msra.mxu0 0.0
    %449 = vmatprep.subr.mxu0 0.0
    %450 = vmatpush2.msra.mxu0 0.0
    %451 = vmatprep.subr.mxu0 0.0
    %452 = vmatpush2.msra.mxu0 0.0
    %453 = vmatprep.subr.mxu0 0.0
    %454 = vmatpush2.msra.mxu0 0.0
    %455 = vmatprep.mubr.f32.mxu0 0.0
    %456 = vmatmul.mubr.f32.gmra.mxu0 %v389
    %v457 = vpop.f32.mrf.mxu0
    %v458 = vadd.f32 %v383, %v457
    %v459 = vpop.f32.mrf.mxu0
    %460 = vdwg.mxu0
    %v461 = vld [vmem:[%s7] sm:$0x1]
    %v463 = vlaneseq
    %v464 = vshrl.u32 %v463, 7
    %v465 = vsub.s32 0, %v464
    %v466 = vrot.slane %v461, %v465
    %v468 = vadd.f32 %v458, %v466
    %vm469 = vcmask 517120
    %470 = vst.msk [vmem:[#allocation5] sm:$0x3] %vm469, %v468
    // Predicated region
    $region38: #{tpu_custom_call.1} parent=1 // pred_check
      _
    $region39: #{tpu_custom_call.1} parent=1 // pred_check_branch
      %472 = sbr.rel (0) target = $region41
    $region40: #{tpu_custom_call.1} parent=1 // pred_region
      %s474 = ssub.s32 32, 32
      %475 = vsyncadd [#allocation4], %s474
      %s477 = sshll.u32 [#allocation5], 4
      %s478 = int_to_ptr.vmem [resolvable:$true] %s477
      %480 = dma.vmem_to_hbm [thread:$0]  %s478, 32, %s8, [#allocation4]
    $region41: #{tpu_custom_call.1} parent=1 // pred_fallthru
      _
    // Predicated region
    $region42: #{tpu_custom_call.1} parent=1 // pred_check
      _
    $region43: #{tpu_custom_call.1} parent=1 // pred_check_branch
      %482 = sbr.rel (0) target = $region45
    $region44: #{tpu_custom_call.1} parent=1 // pred_region
      %483 = dma.done [#allocation4], 32
    $region45: #{tpu_custom_call.1} parent=1 // pred_fallthru
      _
    %484 = vsyncpa [#allocation3], 1
    %485 = vsyncpa [#allocation4], 1

</llo_original>
